<compile_context>
chip_gen: v7x
topology: tpu7x:2x2x1
jax: 0.10.0
libtpu: 0.0.40
codegen_flags: <defaults>
</compile_context>

<pallas_src>
import functools

import jax
import jax.numpy as jnp
from jax import lax
from jax.experimental import pallas as pl
from jax.experimental.pallas import tpu as pltpu


def _round_up(x, m):
    return ((x + m - 1) // m) * m


def _pick_tile(n, cap, mult):
    """Pick a tile size (multiple of `mult`, <= cap) and the padded extent."""
    npad = _round_up(max(n, 1), mult)
    if npad <= cap:
        return npad, npad
    cap = cap - cap % mult
    for t in range(cap, mult - 1, -mult):
        if npad % t == 0:
            return t, npad
    return cap, _round_up(n, cap)


# ---------------------------------------------------------------------------
# Pallas kernels
# ---------------------------------------------------------------------------

def _mm_kernel(x_ref, w_ref, b_ref, o_ref, acc_ref, *, act):
    """Tiled bf16 matmul, f32 accumulation, fused (+bias, activation) epilogue."""
    @pl.when(pl.program_id(2) == 0)
    def _():
        acc_ref[...] = jnp.zeros_like(acc_ref)

    acc_ref[...] += jnp.dot(x_ref[...], w_ref[...],
                            preferred_element_type=jnp.float32)

    @pl.when(pl.program_id(2) == pl.num_programs(2) - 1)
    def _():
        y = acc_ref[...] + b_ref[...]
        if act == 1:
            y = jnp.maximum(y, 0.0)
        o_ref[...] = y.astype(o_ref.dtype)


def _matmul_bias(x, w, b, *, tk, tn, K, N, act, out_dtype):
    """y = act(x @ w + b); x:(M,K) bf16, w:(Kp,Np) bf16 (scale pre-folded)."""
    M = x.shape[0]
    Kp, Np = w.shape
    tm, Mp = _pick_tile(M, 512, 16)
    xp = jnp.pad(x, ((0, Mp - M), (0, Kp - K)))
    grid = (Mp // tm, Np // tn, Kp // tk)
    out = pl.pallas_call(
        functools.partial(_mm_kernel, act=act),
        out_shape=jax.ShapeDtypeStruct((Mp, Np), out_dtype),
        grid_spec=pltpu.PrefetchScalarGridSpec(
            num_scalar_prefetch=0, grid=grid,
            in_specs=[
                pl.BlockSpec((tm, tk), lambda i, j, k: (i, k)),
                pl.BlockSpec((tk, tn), lambda i, j, k: (k, j)),
                pl.BlockSpec((1, tn), lambda i, j, k: (0, j)),
            ],
            out_specs=pl.BlockSpec((tm, tn), lambda i, j, k: (i, j)),
            scratch_shapes=[pltpu.VMEM((tm, tn), jnp.float32)]),
        compiler_params=pltpu.CompilerParams(
            dimension_semantics=("parallel", "parallel", "arbitrary")),
    )(xp, w, b)
    return out[:M, :N]


def _gmm_kernel(x_ref, w_ref, b_ref, o_ref, *, act):
    """Per-group bf16 matmul with fused bias + activation (stage-4 gconv)."""
    y = jnp.dot(x_ref[...], w_ref[...],
                preferred_element_type=jnp.float32) + b_ref[...]
    if act == 1:
        y = jnp.maximum(y, 0.0)
    o_ref[...] = y.astype(o_ref.dtype)


def _grouped_matmul(xg, wg, bg, act):
    """xg:(G,M,Kg) bf16, wg:(G,Kg,Og) bf16, bg:(G,1,Og) f32 -> (G,M,Og) bf16."""
    G, M, Kg = xg.shape
    Og = wg.shape[2]
    tm, Mp = _pick_tile(M, 256, 16)
    xgp = jnp.pad(xg, ((0, 0), (0, Mp - M), (0, 0)))
    out = pl.pallas_call(
        functools.partial(_gmm_kernel, act=act),
        out_shape=jax.ShapeDtypeStruct((G, Mp, Og), jnp.bfloat16),
        grid_spec=pltpu.PrefetchScalarGridSpec(
            num_scalar_prefetch=0, grid=(G, Mp // tm),
            in_specs=[
                pl.BlockSpec((None, tm, Kg), lambda g, i: (g, i, 0)),
                pl.BlockSpec((None, Kg, Og), lambda g, i: (g, 0, 0)),
                pl.BlockSpec((None, 1, Og), lambda g, i: (g, 0, 0)),
            ],
            out_specs=pl.BlockSpec((None, tm, Og), lambda g, i: (g, i, 0))),
        compiler_params=pltpu.CompilerParams(
            dimension_semantics=("parallel", "parallel")),
    )(xgp, wg, bg)
    return out[:, :M, :]


def _se_scale_kernel(*refs, denom, has_res):
    """Fused SE block: pool -> fc1 -> relu -> fc2 -> sigmoid -> scale(+res) -> relu."""
    if has_res:
        x_ref, r_ref, w1_ref, b1_ref, w2_ref, b2_ref, o_ref = refs
    else:
        x_ref, w1_ref, b1_ref, w2_ref, b2_ref, o_ref = refs
        r_ref = None
    x = x_ref[...]                                                     # (HWp, C) bf16
    pooled = jnp.sum(x.astype(jnp.float32), axis=0, keepdims=True) * (1.0 / denom)
    p8 = jnp.broadcast_to(pooled, (8, pooled.shape[1])).astype(jnp.bfloat16)
    h = jnp.dot(p8, w1_ref[...], preferred_element_type=jnp.float32) + b1_ref[...]
    h = jnp.maximum(h, 0.0)
    s = jnp.dot(h.astype(jnp.bfloat16), w2_ref[...],
                preferred_element_type=jnp.float32) + b2_ref[...]
    s = jax.nn.sigmoid(s)[0:1, :]                                      # (1, C) f32
    y = x.astype(jnp.float32) * s
    if has_res:
        y = y + r_ref[...].astype(jnp.float32)
    o_ref[...] = jnp.maximum(y, 0.0).astype(o_ref.dtype)


@functools.partial(jax.jit, static_argnames=("has_res",))
def se_scale_block(m, res, w1, b1, w2, b2, *, has_res):
    """relu(m * SE(m) (+ res)); m/res NHWC, SE weights pre-transposed (in,out) bf16."""
    B, H, W, C = m.shape
    HW = H * W
    HWp = _round_up(HW, 16)
    mp = jnp.pad(m.reshape(B, HW, C).astype(jnp.bfloat16),
                 ((0, 0), (0, HWp - HW), (0, 0)))
    args = [mp]
    xspec = pl.BlockSpec((None, HWp, C), lambda b: (b, 0, 0))
    in_specs = [xspec]
    if has_res:
        rp = jnp.pad(res.reshape(B, HW, C).astype(jnp.bfloat16),
                     ((0, 0), (0, HWp - HW), (0, 0)))
        args.append(rp)
        in_specs.append(xspec)
    args += [w1, b1, w2, b2]
    in_specs += [pl.BlockSpec((C, C), lambda b: (0, 0)),
                 pl.BlockSpec((1, C), lambda b: (0, 0)),
                 pl.BlockSpec((C, C), lambda b: (0, 0)),
                 pl.BlockSpec((1, C), lambda b: (0, 0))]
    out = pl.pallas_call(
        functools.partial(_se_scale_kernel, denom=float(HW), has_res=has_res),
        out_shape=jax.ShapeDtypeStruct((B, HWp, C), jnp.bfloat16),
        grid_spec=pltpu.PrefetchScalarGridSpec(
            num_scalar_prefetch=0, grid=(B,),
            in_specs=in_specs,
            out_specs=pl.BlockSpec((None, HWp, C), lambda b: (b, 0, 0))),
        compiler_params=pltpu.CompilerParams(dimension_semantics=("parallel",)),
    )(*args)
    return out[:, :HW, :].reshape(B, H, W, C)


def _avgpool_kernel(x_ref, o_ref, *, denom):
    o_ref[...] = (jnp.sum(x_ref[...].astype(jnp.float32), axis=0, keepdims=True)
                  * (1.0 / denom))


@jax.jit
def global_avg_pool(x):
    """Mean over spatial; x:(B,H,W,C) bf16 -> (B,C) f32."""
    B, H, W, C = x.shape
    HW = H * W
    HWp = _round_up(HW, 16)
    xp = jnp.pad(x.reshape(B, HW, C), ((0, 0), (0, HWp - HW), (0, 0)))
    out = pl.pallas_call(
        functools.partial(_avgpool_kernel, denom=float(HW)),
        out_shape=jax.ShapeDtypeStruct((B, 1, C), jnp.float32),
        grid_spec=pltpu.PrefetchScalarGridSpec(
            num_scalar_prefetch=0, grid=(B,),
            in_specs=[pl.BlockSpec((None, HWp, C), lambda b: (b, 0, 0))],
            out_specs=pl.BlockSpec((None, 1, C), lambda b: (b, 0, 0))),
        compiler_params=pltpu.CompilerParams(dimension_semantics=("parallel",)),
    )(xp)
    return out.reshape(B, C)


# ---------------------------------------------------------------------------
# Convolution wrappers (im2col glue + Pallas matmuls)
# ---------------------------------------------------------------------------

def _im2col(x, kh, kw, stride, pad, channel_major):
    B, H, W, C = x.shape
    if pad:
        x = jnp.pad(x, ((0, 0), (pad, pad), (pad, pad), (0, 0)))
    Ho = (H + 2 * pad - kh) // stride + 1
    Wo = (W + 2 * pad - kw) // stride + 1
    cols = []
    for i in range(kh):
        for j in range(kw):
            cols.append(lax.slice(
                x, (0, i, j, 0),
                (B, i + (Ho - 1) * stride + 1, j + (Wo - 1) * stride + 1, C),
                (1, stride, stride, 1)))
    if channel_major:                      # feature index = c*kh*kw + kidx
        p = jnp.stack(cols, axis=4).reshape(B, Ho, Wo, C * kh * kw)
    else:                                  # feature index = kidx*C + c
        p = jnp.stack(cols, axis=3).reshape(B, Ho, Wo, kh * kw * C)
    return p, Ho, Wo


@functools.partial(jax.jit, static_argnames=("k", "stride", "padding", "K", "N",
                                             "tk", "tn", "act"))
def conv_dense(x, w, b, *, k, stride, padding, K, N, tk, tn, act):
    """Dense (or block-diagonal-grouped) conv with folded BN; NHWC bf16 out."""
    B, H, W, Cin = x.shape
    x = x.astype(jnp.bfloat16)
    if k == 1 and stride == 1 and padding == 0:
        xm = x.reshape(B * H * W, Cin)
        Ho, Wo = H, W
    else:
        p, Ho, Wo = _im2col(x, k, k, stride, padding, channel_major=False)
        xm = p.reshape(B * Ho * Wo, k * k * Cin)
    y = _matmul_bias(xm, w, b, tk=tk, tn=tn, K=K, N=N, act=act,
                     out_dtype=jnp.bfloat16)
    return y.reshape(B, Ho, Wo, N)


@functools.partial(jax.jit, static_argnames=("k", "stride", "padding", "groups",
                                             "act"))
def conv_grouped(x, wg, bg, *, k, stride, padding, groups, act):
    """Grouped conv (per-group matmul) for Og >= 128; NHWC bf16 out."""
    B, H, W, Cin = x.shape
    x = x.astype(jnp.bfloat16)
    p, Ho, Wo = _im2col(x, k, k, stride, padding, channel_major=True)
    M = B * Ho * Wo
    Cg = Cin // groups
    xg = p.reshape(M, groups, Cg * k * k).transpose(1, 0, 2)
    y = _grouped_matmul(xg, wg, bg, act)                     # (G, M, Og)
    O = groups * wg.shape[2]
    return y.transpose(1, 0, 2).reshape(B, Ho, Wo, O)


@functools.partial(jax.jit, static_argnames=("K", "N", "tk", "tn", "act"))
def dense_layer(x, w, b, *, K, N, tk, tn, act):
    """Linear layer (pre-transposed / padded / bf16 weight); f32 output."""
    return _matmul_bias(x.astype(jnp.bfloat16), w, b, tk=tk, tn=tn, K=K, N=N,
                        act=act, out_dtype=jnp.float32)


@jax.jit
def maxpool3x3s2p1(x):
    """MaxPool2d(kernel=3, stride=2, padding=1); pairwise max, fused by XLA."""
    B, H, W, C = x.shape
    Ho = (H + 2 - 3) // 2 + 1
    Wo = (W + 2 - 3) // 2 + 1
    xp = jnp.pad(x, ((0, 0), (1, 1), (1, 1), (0, 0)),
                 constant_values=-jnp.inf)
    out = None
    for i in range(3):
        for j in range(3):
            v = lax.slice(
                xp, (0, i, j, 0),
                (B, i + 2 * (Ho - 1) + 1, j + 2 * (Wo - 1) + 1, C),
                (1, 2, 2, 1))
            out = v if out is None else jnp.maximum(out, v)
    return out


# ---------------------------------------------------------------------------
# Model (parameters initialized deterministically, mirroring _initialize_weights)
# ---------------------------------------------------------------------------

class KeyGen:
    def __init__(self, seed=0):
        self.base = jax.random.PRNGKey(seed)
        self.count = 0

    def __call__(self):
        self.count += 1
        return jax.random.fold_in(self.base, self.count)


class ConvBNReLU:
    """Conv_BN_ReLU: conv(bias=False) + BatchNorm2d(eps=1e-9, eval) + optional ReLU.

    Weights are laid out once at construction time:
      - dense / block-diagonal-grouped convs: (kh*kw*Cin, O), BN scale folded,
        padded to (Kp, Np) tile multiples, bf16
      - per-group convs (Og >= 128):          (G, Cg*kh*kw, Og), scale folded, bf16
    """

    def __init__(self, kg, in_ch, out_ch, k, stride=1, padding=0, groups=1,
                 has_relu=True, first=False):
        std = 0.01 if first else 1.0 / (in_ch // groups)
        w = std * jax.random.normal(kg(), (out_ch, in_ch // groups, k, k),
                                    jnp.float32)
        gamma = jnp.ones((out_ch,), jnp.float32)
        beta = jnp.full((out_ch,), 1e-4, jnp.float32)
        mean = jnp.zeros((out_ch,), jnp.float32)
        var = jnp.ones((out_ch,), jnp.float32)
        scale = gamma / jnp.sqrt(var + 1e-9)
        bias = beta - mean * scale

        self.k, self.stride, self.padding, self.groups = k, stride, padding, groups
        self.act = 1 if has_relu else 0
        Og = out_ch // groups
        Cg = in_ch // groups

        if groups == 1 or Og < 128:
            if groups == 1:
                wd = jnp.transpose(w, (2, 3, 1, 0)).reshape(k * k * in_ch, out_ch)
            else:
                # block-diagonal dense weight for lane-dense grouped conv
                w_g = w.reshape(groups, Og, Cg, k, k)
                blocks = jnp.transpose(w_g, (0, 3, 4, 2, 1))     # (G,kh,kw,Cg,Og)
                wd = jnp.zeros((k, k, groups, Cg, groups, Og), jnp.float32)
                idx = jnp.arange(groups)
                wd = wd.at[:, :, idx, :, idx, :].set(blocks)
                wd = wd.reshape(k * k * in_ch, out_ch)
            wd = wd * scale[None, :]
            K, N = wd.shape
            self.tk, Kp = _pick_tile(K, 768, 128)
            self.tn, Np = _pick_tile(N, 256, 128)
            self.w = jnp.pad(wd, ((0, Kp - K), (0, Np - N))).astype(jnp.bfloat16)
            self.b = jnp.pad(bias, (0, Np - N)).reshape(1, Np)
            self.K, self.N = K, N
            self.grouped = False
        else:
            wg = (w.reshape(groups, Og, Cg, k, k)
                   .transpose(0, 2, 3, 4, 1)
                   .reshape(groups, Cg * k * k, Og))
            wg = wg * scale.reshape(groups, 1, Og)
            self.w = wg.astype(jnp.bfloat16)
            self.b = bias.reshape(groups, 1, Og)
            self.grouped = True

    def __call__(self, x, act=None):
        act = self.act if act is None else act
        if self.grouped:
            return conv_grouped(x, self.w, self.b, k=self.k, stride=self.stride,
                                padding=self.padding, groups=self.groups, act=act)
        return conv_dense(x, self.w, self.b, k=self.k, stride=self.stride,
                          padding=self.padding, K=self.K, N=self.N,
                          tk=self.tk, tn=self.tn, act=act)


class ShuffleV2Block:
    def __init__(self, kg, in_channels, out_channels, stride, groups,
                 has_proj=False, has_se=False):
        assert stride in (1, 2)
        self.stride, self.has_proj, self.has_se = stride, has_proj, has_se
        if stride == 2:
            self.down = ConvBNReLU(kg, out_channels * 2, out_channels * 2, 1, 1, 0)
        if has_proj:
            self.proj = ConvBNReLU(kg, in_channels, out_channels, 3, stride, 1,
                                   has_relu=False)
        self.pw1 = ConvBNReLU(kg, in_channels, out_channels, 1, 1, 0)
        self.gconv = ConvBNReLU(kg, out_channels, out_channels, 3, stride, 1,
                                groups=groups)
        self.pw2 = ConvBNReLU(kg, out_channels, out_channels, 1, 1, 0,
                              has_relu=False)
        if has_se:
            C = out_channels
            w1 = 0.01 * jax.random.normal(kg(), (C, C), jnp.float32)
            w2 = 0.01 * jax.random.normal(kg(), (C, C), jnp.float32)
            self.se_w1 = w1.T.astype(jnp.bfloat16)          # (in, out)
            self.se_b1 = jnp.zeros((1, C), jnp.float32)
            self.se_w2 = w2.T.astype(jnp.bfloat16)
            self.se_b2 = jnp.zeros((1, C), jnp.float32)

    def __call__(self, x):
        # channel_shuffle: even channels -> proj branch, odd channels -> main
        # TODO(synk): the stride-2 channel slices / final concat remain XLA glue;
        # folding the shuffle into the producer/consumer convs is left out.
        proj, main = x[..., 0::2], x[..., 1::2]
        if self.has_proj:
            # post-concat ReLU folded into the projection conv epilogue
            proj_out = self.proj(proj, act=1)
        else:
            # pass-through half is already post-ReLU upstream -> identity
            proj_out = proj
        m = self.pw1(main)
        m = self.gconv(m)
        m = self.pw2(m)                                   # BN only, no ReLU
        if self.has_se:
            res = None if self.has_proj else main
            m = se_scale_block(m, res, self.se_w1, self.se_b1,
                               self.se_w2, self.se_b2,
                               has_res=not self.has_proj)
        else:  # not used by model_size='large'
            m = jnp.maximum(m if self.has_proj else m + main, 0.0)
        out = jnp.concatenate([proj_out.astype(m.dtype), m], axis=-1)
        if self.stride == 2:
            out = self.down(out)
        return out


class ShuffleNetV2:
    """Eval-mode forward of ShuffleNetV2-Large."""

    def __init__(self, n_class=1000, model_size='large', seed=0):
        assert model_size == 'large'
        kg = KeyGen(seed)
        self.n_class = n_class
        self.first_conv = [
            ConvBNReLU(kg, 3, 64, 3, 2, 1, first=True),
            ConvBNReLU(kg, 64, 64, 3, 1, 1, first=True),
            ConvBNReLU(kg, 64, 128, 3, 1, 1, first=True),
        ]
        stage_repeats = [10, 10, 23, 10]
        mid_outputs = [64, 128, 256, 512]
        enable_stride = [False, True, True, True]
        self.features = []
        input_channel = 64
        for s, o, es in zip(stage_repeats, mid_outputs, enable_stride):
            stage = []
            for i in range(s):
                stride = 1 if (not es or i > 0) else 2
                has_proj = (i == 0)
                stage.append(ShuffleV2Block(kg, input_channel, o * 2, stride,
                                            groups=8, has_proj=has_proj,
                                            has_se=True))
                input_channel = o * 2
            self.features.append(stage)
        # TODO(synk): ExtraLabelPredict heads (predict_56/28/14) and Dropout(0.2)
        # are only active in training mode; this implements the eval forward path.
        self.conv_last = ConvBNReLU(kg, input_channel * 2, 1280, 3, 1, 1)
        fc_w = 0.01 * jax.random.normal(kg(), (n_class, 1280), jnp.float32)
        fc_b = jnp.zeros((n_class,), jnp.float32)
        self.fc_tk, Kp = _pick_tile(1280, 768, 128)
        self.fc_tn, Np = _pick_tile(n_class, 256, 128)
        self.fc_w = jnp.pad(fc_w.T, ((0, Kp - 1280), (0, Np - n_class))
                            ).astype(jnp.bfloat16)
        self.fc_b = jnp.pad(fc_b, (0, Np - n_class)).reshape(1, Np)

    def __call__(self, x_nchw):
        x = jnp.transpose(x_nchw, (0, 2, 3, 1)).astype(jnp.float32)  # NCHW -> NHWC
        for c in self.first_conv:
            x = c(x)
        x = maxpool3x3s2p1(x)
        for stage in self.features:
            for blk in stage:
                x = blk(x)
        x = self.conv_last(x)
        pooled = global_avg_pool(x)              # generalized AvgPool2d(7) -> (B,1280)
        return dense_layer(pooled, self.fc_w, self.fc_b, K=1280, N=self.n_class,
                           tk=self.fc_tk, tn=self.fc_tn, act=0)


if __name__ == "__main__":
    # Small input: 32x32 survives the /32 downsampling chain (32->16->8->8->4->2->1).
    key = jax.random.PRNGKey(0)
    x = jax.random.normal(key, (2, 3, 32, 32), jnp.float32)
    model = ShuffleNetV2(n_class=1000, model_size='large', seed=0)
    logits = model(x)
    logits = jax.block_until_ready(logits)
    assert logits.shape == (2, 1000), logits.shape
    assert bool(jnp.all(jnp.isfinite(logits)))
    print("KERNEL_OK")
</pallas_src>

<mosaic_0001>
module attributes {stable_mosaic.version = 11 : i64} {
  func.func @_mm_kernel(%arg0: i32, %arg1: i32, %arg2: i32, %arg3: memref<512x128xbf16, #tpu.memory_space<vmem>>, %arg4: memref<128x128xbf16, #tpu.memory_space<vmem>>, %arg5: memref<1x128xf32, #tpu.memory_space<vmem>>, %arg6: memref<512x128xbf16, #tpu.memory_space<vmem>>, %arg7: memref<512x128xf32, #tpu.memory_space<vmem>>) attributes {dimension_semantics = [#tpu.dimension_semantics<parallel>, #tpu.dimension_semantics<parallel>, #tpu.dimension_semantics<arbitrary>], iteration_bounds = array<i64: 1, 1, 1>, scalar_prefetch = 0 : i64, scratch_operands = 1 : i64, tpu.core_type = #tpu.core_type<tc>, window_params = [{transform_indices = @transform_0, window_bounds = array<i64: 512, 128>}, {transform_indices = @transform_1, window_bounds = array<i64: 128, 128>}, {transform_indices = @transform_2, window_bounds = array<i64: 1, 128>}, {transform_indices = @transform_3, window_bounds = array<i64: 512, 128>}]} {
    %c0_i32 = arith.constant 0 : i32
    %0 = arith.cmpi eq, %arg2, %c0_i32 : i32
    %1 = arith.extui %0 : i1 to i32
    %c0_i32_0 = arith.constant 0 : i32
    %2 = arith.cmpi ne, %1, %c0_i32_0 : i32
    scf.if %2 {
      %cst_10 = arith.constant 0.000000e+00 : f32
      %12 = vector.broadcast %cst_10 : f32 to vector<512x128xf32>
      %c0_11 = arith.constant 0 : index
      %c0_12 = arith.constant 0 : index
      %13 = vector.load %arg7[%c0_11, %c0_12] : memref<512x128xf32, #tpu.memory_space<vmem>>, vector<512x128xf32>
      tpu.vector_store %arg7[%c0_11, %c0_12], %12 {strides = array<i32>} : memref<512x128xf32, #tpu.memory_space<vmem>>, vector<512x128xf32>,
    } else {
    }
    %c0 = arith.constant 0 : index
    %c0_1 = arith.constant 0 : index
    %3 = vector.load %arg7[%c0, %c0_1] : memref<512x128xf32, #tpu.memory_space<vmem>>, vector<512x128xf32>
    %c0_2 = arith.constant 0 : index
    %c0_3 = arith.constant 0 : index
    %4 = vector.load %arg3[%c0_2, %c0_3] : memref<512x128xbf16, #tpu.memory_space<vmem>>, vector<512x128xbf16>
    %c0_4 = arith.constant 0 : index
    %c0_5 = arith.constant 0 : index
    %5 = vector.load %arg4[%c0_4, %c0_5] : memref<128x128xbf16, #tpu.memory_space<vmem>>, vector<128x128xbf16>
    %cst = arith.constant dense<0.000000e+00> : vector<512x128xf32>
    %6 = tpu.matmul %4, %5, %cst {dimension_numbers = #tpu.dot_dimension_numbers<[1], [0], [0], [1], [0, 0, 1, 1], [], []>} : vector<512x128xbf16>, vector<128x128xbf16>, vector<512x128xf32> -> vector<512x128xf32>
    %7 = arith.addf %3, %6 : vector<512x128xf32>
    %c0_6 = arith.constant 0 : index
    %c0_7 = arith.constant 0 : index
    %8 = vector.load %arg7[%c0_6, %c0_7] : memref<512x128xf32, #tpu.memory_space<vmem>>, vector<512x128xf32>
    tpu.vector_store %arg7[%c0_6, %c0_7], %7 {strides = array<i32>} : memref<512x128xf32, #tpu.memory_space<vmem>>, vector<512x128xf32>,
    %c0_i32_8 = arith.constant 0 : i32
    %9 = arith.cmpi eq, %arg2, %c0_i32_8 : i32
    %10 = arith.extui %9 : i1 to i32
    %c0_i32_9 = arith.constant 0 : i32
    %11 = arith.cmpi ne, %10, %c0_i32_9 : i32
    scf.if %11 {
      %c0_10 = arith.constant 0 : index
      %c0_11 = arith.constant 0 : index
      %12 = vector.load %arg7[%c0_10, %c0_11] : memref<512x128xf32, #tpu.memory_space<vmem>>, vector<512x128xf32>
      %c0_12 = arith.constant 0 : index
      %c0_13 = arith.constant 0 : index
      %13 = vector.load %arg5[%c0_12, %c0_13] : memref<1x128xf32, #tpu.memory_space<vmem>>, vector<1x128xf32>
      %14 = vector.broadcast %13 : vector<1x128xf32> to vector<512x128xf32>
      %15 = arith.addf %12, %14 : vector<512x128xf32>
      %cst_14 = arith.constant 0.000000e+00 : f32
      %16 = vector.broadcast %cst_14 : f32 to vector<512x128xf32>
      %17 = arith.maximumf %15, %16 : vector<512x128xf32>
      %18 = arith.truncf %17 : vector<512x128xf32> to vector<512x128xbf16>
      %c0_15 = arith.constant 0 : index
      %c0_16 = arith.constant 0 : index
      %19 = vector.load %arg6[%c0_15, %c0_16] : memref<512x128xbf16, #tpu.memory_space<vmem>>, vector<512x128xbf16>
      tpu.vector_store %arg6[%c0_15, %c0_16], %18 {strides = array<i32>} : memref<512x128xbf16, #tpu.memory_space<vmem>>, vector<512x128xbf16>,
    } else {
    }
    return
  }
  func.func @transform_0(%arg0: i32, %arg1: i32, %arg2: i32) -> (i32, i32) {
    %c0_i32 = arith.constant 0 : i32
    return %arg0, %arg2 : i32, i32
  }
  func.func @transform_1(%arg0: i32, %arg1: i32, %arg2: i32) -> (i32, i32) {
    %c0_i32 = arith.constant 0 : i32
    return %arg2, %arg1 : i32, i32
  }
  func.func @transform_2(%arg0: i32, %arg1: i32, %arg2: i32) -> (i32, i32) {
    %c0_i32 = arith.constant 0 : i32
    %c0_i32_0 = arith.constant 0 : i32
    return %c0_i32, %arg1 : i32, i32
  }
  func.func @transform_3(%arg0: i32, %arg1: i32, %arg2: i32) -> (i32, i32) {
    %c0_i32 = arith.constant 0 : i32
    return %arg0, %arg1 : i32, i32
  }
}

</mosaic_0001>

<llo_original>
// kernel: conv_dense.1
$region0: #{conv_dense.1}
  #allocation0 [shape = 'u32[]', space=smem, size = 0x4, offset = 0x4, fixed_abs, tag = 'smem constant byte address 0x4 - core index']
  #allocation1 [shape = 'u32[144,128]{1,0:T(1,128)}', space=vmem, size = 0x12000, scoped, tag = 'internal scratch']
  #allocation2 [shape = 'f32[512,128]{1,0:T(8,128)}', space=vmem, size = 0x40000, scoped, tag = 'scratch operand']
  %s0 = inlined_call_operand.vmem [shape: bf16[512,128], index: 0, kind: input, shape index: {}]
  %s1 = inlined_call_operand.vmem [shape: bf16[128,128], index: 1, kind: input, shape index: {}]
  %s2 = inlined_call_operand.vmem [shape: f32[1,128], index: 2, kind: input, shape index: {}]
  %s3 = inlined_call_operand.hbm [shape: bf16[512,128], index: 3, kind: output, shape index: {}]
  %s4 = sld [smem:[#allocation0]]
  $region30: #{conv_dense.1} parent=0
    _
  %s6 = ssub.s32 1, %s4
  %s7 = scalar_select 0, %s6, %s4
  $region1: #{conv_dense.1} parent=0
    #allocation3 [shape = 'u8[131072]{0}', space=vmem, size = 0x20000, scoped, tag = 'output window, operand 0, single buffered']
    #allocation4 [shape = 's32[1]{0}', space=sflag, size = 0x4, scoped, tag = 'scoped memory for conv_dense.1']
    %8 = vsyncpa [#allocation4], 0
    // Predicated region
    $region2: #{conv_dense.1} parent=1 // pred_check
      _
    $region3: #{conv_dense.1} parent=1 // pred_check_branch
      %10 = sbr.rel (0) target = $region5
    $region4: #{conv_dense.1} parent=1 // pred_region
      _
    $region5: #{conv_dense.1} parent=1 // pred_fallthru
      _
    // Predicated region
    $region6: #{conv_dense.1} parent=1 // pred_check
      _
    $region7: #{conv_dense.1} parent=1 // pred_check_branch
      %12 = sbr.rel (0) target = $region9
    $region8: #{conv_dense.1} parent=1 // pred_region
      _
    $region9: #{conv_dense.1} parent=1 // pred_fallthru
      _
    // Predicated region
    $region10: #{conv_dense.1} parent=1 // pred_check
      _
    $region11: #{conv_dense.1} parent=1 // pred_check_branch
      %14 = sbr.rel (0) target = $region13
    $region12: #{conv_dense.1} parent=1 // pred_region
      _
    $region13: #{conv_dense.1} parent=1 // pred_fallthru
      _
    %p16 = scmp.eq.s32.totalorder 0, 0
    // Predicated region
    $region14: #{conv_dense.1} parent=1 // pred_check
      %p17 = pneg %p16
    $region15: #{conv_dense.1} parent=1 // pred_check_branch
      %19 = sbr.rel (%p17) target = $region17
    $region16: #{conv_dense.1} parent=1 // pred_region
      %20 = vst [vmem:[#allocation2] sm:$0xff] 0.0
      %21 = vst [vmem:[#allocation2 + $0x8] sm:$0xff] 0.0
      %22 = vst [vmem:[#allocation2 + $0x10] sm:$0xff] 0.0
      %23 = vst [vmem:[#allocation2 + $0x18] sm:$0xff] 0.0
      %24 = vst [vmem:[#allocation2 + $0x20] sm:$0xff] 0.0
      %25 = vst [vmem:[#allocation2 + $0x28] sm:$0xff] 0.0
      %26 = vst [vmem:[#allocation2 + $0x30] sm:$0xff] 0.0
      %27 = vst [vmem:[#allocation2 + $0x38] sm:$0xff] 0.0
      %28 = vst [vmem:[#allocation2 + $0x40] sm:$0xff] 0.0
      %29 = vst [vmem:[#allocation2 + $0x48] sm:$0xff] 0.0
      %30 = vst [vmem:[#allocation2 + $0x50] sm:$0xff] 0.0
      %31 = vst [vmem:[#allocation2 + $0x58] sm:$0xff] 0.0
      %32 = vst [vmem:[#allocation2 + $0x60] sm:$0xff] 0.0
      %33 = vst [vmem:[#allocation2 + $0x68] sm:$0xff] 0.0
      %34 = vst [vmem:[#allocation2 + $0x70] sm:$0xff] 0.0
      %35 = vst [vmem:[#allocation2 + $0x78] sm:$0xff] 0.0
      %36 = vst [vmem:[#allocation2 + $0x80] sm:$0xff] 0.0
      %37 = vst [vmem:[#allocation2 + $0x88] sm:$0xff] 0.0
      %38 = vst [vmem:[#allocation2 + $0x90] sm:$0xff] 0.0
      %39 = vst [vmem:[#allocation2 + $0x98] sm:$0xff] 0.0
      %40 = vst [vmem:[#allocation2 + $0xa0] sm:$0xff] 0.0
      %41 = vst [vmem:[#allocation2 + $0xa8] sm:$0xff] 0.0
      %42 = vst [vmem:[#allocation2 + $0xb0] sm:$0xff] 0.0
      %43 = vst [vmem:[#allocation2 + $0xb8] sm:$0xff] 0.0
      %44 = vst [vmem:[#allocation2 + $0xc0] sm:$0xff] 0.0
      %45 = vst [vmem:[#allocation2 + $0xc8] sm:$0xff] 0.0
      %46 = vst [vmem:[#allocation2 + $0xd0] sm:$0xff] 0.0
      %47 = vst [vmem:[#allocation2 + $0xd8] sm:$0xff] 0.0
      %48 = vst [vmem:[#allocation2 + $0xe0] sm:$0xff] 0.0
      %49 = vst [vmem:[#allocation2 + $0xe8] sm:$0xff] 0.0
      %50 = vst [vmem:[#allocation2 + $0xf0] sm:$0xff] 0.0
      %51 = vst [vmem:[#allocation2 + $0xf8] sm:$0xff] 0.0
      %52 = vst [vmem:[#allocation2 + $0x100] sm:$0xff] 0.0
      %53 = vst [vmem:[#allocation2 + $0x108] sm:$0xff] 0.0
      %54 = vst [vmem:[#allocation2 + $0x110] sm:$0xff] 0.0
      %55 = vst [vmem:[#allocation2 + $0x118] sm:$0xff] 0.0
      %56 = vst [vmem:[#allocation2 + $0x120] sm:$0xff] 0.0
      %57 = vst [vmem:[#allocation2 + $0x128] sm:$0xff] 0.0
      %58 = vst [vmem:[#allocation2 + $0x130] sm:$0xff] 0.0
      %59 = vst [vmem:[#allocation2 + $0x138] sm:$0xff] 0.0
      %60 = vst [vmem:[#allocation2 + $0x140] sm:$0xff] 0.0
      %61 = vst [vmem:[#allocation2 + $0x148] sm:$0xff] 0.0
      %62 = vst [vmem:[#allocation2 + $0x150] sm:$0xff] 0.0
      %63 = vst [vmem:[#allocation2 + $0x158] sm:$0xff] 0.0
      %64 = vst [vmem:[#allocation2 + $0x160] sm:$0xff] 0.0
      %65 = vst [vmem:[#allocation2 + $0x168] sm:$0xff] 0.0
      %66 = vst [vmem:[#allocation2 + $0x170] sm:$0xff] 0.0
      %67 = vst [vmem:[#allocation2 + $0x178] sm:$0xff] 0.0
      %68 = vst [vmem:[#allocation2 + $0x180] sm:$0xff] 0.0
      %69 = vst [vmem:[#allocation2 + $0x188] sm:$0xff] 0.0
      %70 = vst [vmem:[#allocation2 + $0x190] sm:$0xff] 0.0
      %71 = vst [vmem:[#allocation2 + $0x198] sm:$0xff] 0.0
      %72 = vst [vmem:[#allocation2 + $0x1a0] sm:$0xff] 0.0
      %73 = vst [vmem:[#allocation2 + $0x1a8] sm:$0xff] 0.0
      %74 = vst [vmem:[#allocation2 + $0x1b0] sm:$0xff] 0.0
      %75 = vst [vmem:[#allocation2 + $0x1b8] sm:$0xff] 0.0
      %76 = vst [vmem:[#allocation2 + $0x1c0] sm:$0xff] 0.0
      %77 = vst [vmem:[#allocation2 + $0x1c8] sm:$0xff] 0.0
      %78 = vst [vmem:[#allocation2 + $0x1d0] sm:$0xff] 0.0
      %79 = vst [vmem:[#allocation2 + $0x1d8] sm:$0xff] 0.0
      %80 = vst [vmem:[#allocation2 + $0x1e0] sm:$0xff] 0.0
      %81 = vst [vmem:[#allocation2 + $0x1e8] sm:$0xff] 0.0
      %82 = vst [vmem:[#allocation2 + $0x1f0] sm:$0xff] 0.0
      %83 = vst [vmem:[#allocation2 + $0x1f8] sm:$0xff] 0.0
    $region17: #{conv_dense.1} parent=1 // pred_fallthru
      _
    %v84 = vld [vmem:[#allocation2] sm:$0xff]
    %v85 = vld [vmem:[#allocation2 + $0x8] sm:$0xff]
    %v86 = vld [vmem:[#allocation2 + $0x10] sm:$0xff]
    %v87 = vld [vmem:[#allocation2 + $0x18] sm:$0xff]
    %v88 = vld [vmem:[#allocation2 + $0x20] sm:$0xff]
    %v89 = vld [vmem:[#allocation2 + $0x28] sm:$0xff]
    %v90 = vld [vmem:[#allocation2 + $0x30] sm:$0xff]
    %v91 = vld [vmem:[#allocation2 + $0x38] sm:$0xff]
    %v92 = vld [vmem:[#allocation2 + $0x40] sm:$0xff]
    %v93 = vld [vmem:[#allocation2 + $0x48] sm:$0xff]
    %v94 = vld [vmem:[#allocation2 + $0x50] sm:$0xff]
    %v95 = vld [vmem:[#allocation2 + $0x58] sm:$0xff]
    %v96 = vld [vmem:[#allocation2 + $0x60] sm:$0xff]
    %v97 = vld [vmem:[#allocation2 + $0x68] sm:$0xff]
    %v98 = vld [vmem:[#allocation2 + $0x70] sm:$0xff]
    %v99 = vld [vmem:[#allocation2 + $0x78] sm:$0xff]
    %v100 = vld [vmem:[#allocation2 + $0x80] sm:$0xff]
    %v101 = vld [vmem:[#allocation2 + $0x88] sm:$0xff]
    %v102 = vld [vmem:[#allocation2 + $0x90] sm:$0xff]
    %v103 = vld [vmem:[#allocation2 + $0x98] sm:$0xff]
    %v104 = vld [vmem:[#allocation2 + $0xa0] sm:$0xff]
    %v105 = vld [vmem:[#allocation2 + $0xa8] sm:$0xff]
    %v106 = vld [vmem:[#allocation2 + $0xb0] sm:$0xff]
    %v107 = vld [vmem:[#allocation2 + $0xb8] sm:$0xff]
    %v108 = vld [vmem:[#allocation2 + $0xc0] sm:$0xff]
    %v109 = vld [vmem:[#allocation2 + $0xc8] sm:$0xff]
    %v110 = vld [vmem:[#allocation2 + $0xd0] sm:$0xff]
    %v111 = vld [vmem:[#allocation2 + $0xd8] sm:$0xff]
    %v112 = vld [vmem:[#allocation2 + $0xe0] sm:$0xff]
    %v113 = vld [vmem:[#allocation2 + $0xe8] sm:$0xff]
    %v114 = vld [vmem:[#allocation2 + $0xf0] sm:$0xff]
    %v115 = vld [vmem:[#allocation2 + $0xf8] sm:$0xff]
    %v116 = vld [vmem:[#allocation2 + $0x100] sm:$0xff]
    %v117 = vld [vmem:[#allocation2 + $0x108] sm:$0xff]
    %v118 = vld [vmem:[#allocation2 + $0x110] sm:$0xff]
    %v119 = vld [vmem:[#allocation2 + $0x118] sm:$0xff]
    %v120 = vld [vmem:[#allocation2 + $0x120] sm:$0xff]
    %v121 = vld [vmem:[#allocation2 + $0x128] sm:$0xff]
    %v122 = vld [vmem:[#allocation2 + $0x130] sm:$0xff]
    %v123 = vld [vmem:[#allocation2 + $0x138] sm:$0xff]
    %v124 = vld [vmem:[#allocation2 + $0x140] sm:$0xff]
    %v125 = vld [vmem:[#allocation2 + $0x148] sm:$0xff]
    %v126 = vld [vmem:[#allocation2 + $0x150] sm:$0xff]
    %v127 = vld [vmem:[#allocation2 + $0x158] sm:$0xff]
    %v128 = vld [vmem:[#allocation2 + $0x160] sm:$0xff]
    %v129 = vld [vmem:[#allocation2 + $0x168] sm:$0xff]
    %v130 = vld [vmem:[#allocation2 + $0x170] sm:$0xff]
    %v131 = vld [vmem:[#allocation2 + $0x178] sm:$0xff]
    %v132 = vld [vmem:[#allocation2 + $0x180] sm:$0xff]
    %v133 = vld [vmem:[#allocation2 + $0x188] sm:$0xff]
    %v134 = vld [vmem:[#allocation2 + $0x190] sm:$0xff]
    %v135 = vld [vmem:[#allocation2 + $0x198] sm:$0xff]
    %v136 = vld [vmem:[#allocation2 + $0x1a0] sm:$0xff]
    %v137 = vld [vmem:[#allocation2 + $0x1a8] sm:$0xff]
    %v138 = vld [vmem:[#allocation2 + $0x1b0] sm:$0xff]
    %v139 = vld [vmem:[#allocation2 + $0x1b8] sm:$0xff]
    %v140 = vld [vmem:[#allocation2 + $0x1c0] sm:$0xff]
    %v141 = vld [vmem:[#allocation2 + $0x1c8] sm:$0xff]
    %v142 = vld [vmem:[#allocation2 + $0x1d0] sm:$0xff]
    %v143 = vld [vmem:[#allocation2 + $0x1d8] sm:$0xff]
    %v144 = vld [vmem:[#allocation2 + $0x1e0] sm:$0xff]
    %v145 = vld [vmem:[#allocation2 + $0x1e8] sm:$0xff]
    %v146 = vld [vmem:[#allocation2 + $0x1f0] sm:$0xff]
    %v147 = vld [vmem:[#allocation2 + $0x1f8] sm:$0xff]
    %v148 = vld [vmem:[%s0] sm:$0xf]
    %v149 = vld [vmem:[%s0 + $0x4] sm:$0xf]
    %v150 = vld [vmem:[%s0 + $0x8] sm:$0xf]
    %v151 = vld [vmem:[%s0 + $0xc] sm:$0xf]
    %v152 = vld [vmem:[%s0 + $0x10] sm:$0xf]
    %v153 = vld [vmem:[%s0 + $0x14] sm:$0xf]
    %v154 = vld [vmem:[%s0 + $0x18] sm:$0xf]
    %v155 = vld [vmem:[%s0 + $0x1c] sm:$0xf]
    %v156 = vld [vmem:[%s0 + $0x20] sm:$0xf]
    %v157 = vld [vmem:[%s0 + $0x24] sm:$0xf]
    %v158 = vld [vmem:[%s0 + $0x28] sm:$0xf]
    %v159 = vld [vmem:[%s0 + $0x2c] sm:$0xf]
    %v160 = vld [vmem:[%s0 + $0x30] sm:$0xf]
    %v161 = vld [vmem:[%s0 + $0x34] sm:$0xf]
    %v162 = vld [vmem:[%s0 + $0x38] sm:$0xf]
    %v163 = vld [vmem:[%s0 + $0x3c] sm:$0xf]
    %v164 = vld [vmem:[%s0 + $0x40] sm:$0xf]
    %v165 = vld [vmem:[%s0 + $0x44] sm:$0xf]
    %v166 = vld [vmem:[%s0 + $0x48] sm:$0xf]
    %v167 = vld [vmem:[%s0 + $0x4c] sm:$0xf]
    %v168 = vld [vmem:[%s0 + $0x50] sm:$0xf]
    %v169 = vld [vmem:[%s0 + $0x54] sm:$0xf]
    %v170 = vld [vmem:[%s0 + $0x58] sm:$0xf]
    %v171 = vld [vmem:[%s0 + $0x5c] sm:$0xf]
    %v172 = vld [vmem:[%s0 + $0x60] sm:$0xf]
    %v173 = vld [vmem:[%s0 + $0x64] sm:$0xf]
    %v174 = vld [vmem:[%s0 + $0x68] sm:$0xf]
    %v175 = vld [vmem:[%s0 + $0x6c] sm:$0xf]
    %v176 = vld [vmem:[%s0 + $0x70] sm:$0xf]
    %v177 = vld [vmem:[%s0 + $0x74] sm:$0xf]
    %v178 = vld [vmem:[%s0 + $0x78] sm:$0xf]
    %v179 = vld [vmem:[%s0 + $0x7c] sm:$0xf]
    %v180 = vld [vmem:[%s0 + $0x80] sm:$0xf]
    %v181 = vld [vmem:[%s0 + $0x84] sm:$0xf]
    %v182 = vld [vmem:[%s0 + $0x88] sm:$0xf]
    %v183 = vld [vmem:[%s0 + $0x8c] sm:$0xf]
    %v184 = vld [vmem:[%s0 + $0x90] sm:$0xf]
    %v185 = vld [vmem:[%s0 + $0x94] sm:$0xf]
    %v186 = vld [vmem:[%s0 + $0x98] sm:$0xf]
    %v187 = vld [vmem:[%s0 + $0x9c] sm:$0xf]
    %v188 = vld [vmem:[%s0 + $0xa0] sm:$0xf]
    %v189 = vld [vmem:[%s0 + $0xa4] sm:$0xf]
    %v190 = vld [vmem:[%s0 + $0xa8] sm:$0xf]
    %v191 = vld [vmem:[%s0 + $0xac] sm:$0xf]
    %v192 = vld [vmem:[%s0 + $0xb0] sm:$0xf]
    %v193 = vld [vmem:[%s0 + $0xb4] sm:$0xf]
    %v194 = vld [vmem:[%s0 + $0xb8] sm:$0xf]
    %v195 = vld [vmem:[%s0 + $0xbc] sm:$0xf]
    %v196 = vld [vmem:[%s0 + $0xc0] sm:$0xf]
    %v197 = vld [vmem:[%s0 + $0xc4] sm:$0xf]
    %v198 = vld [vmem:[%s0 + $0xc8] sm:$0xf]
    %v199 = vld [vmem:[%s0 + $0xcc] sm:$0xf]
    %v200 = vld [vmem:[%s0 + $0xd0] sm:$0xf]
    %v201 = vld [vmem:[%s0 + $0xd4] sm:$0xf]
    %v202 = vld [vmem:[%s0 + $0xd8] sm:$0xf]
    %v203 = vld [vmem:[%s0 + $0xdc] sm:$0xf]
    %v204 = vld [vmem:[%s0 + $0xe0] sm:$0xf]
    %v205 = vld [vmem:[%s0 + $0xe4] sm:$0xf]
    %v206 = vld [vmem:[%s0 + $0xe8] sm:$0xf]
    %v207 = vld [vmem:[%s0 + $0xec] sm:$0xf]
    %v208 = vld [vmem:[%s0 + $0xf0] sm:$0xf]
    %v209 = vld [vmem:[%s0 + $0xf4] sm:$0xf]
    %v210 = vld [vmem:[%s0 + $0xf8] sm:$0xf]
    %v211 = vld [vmem:[%s0 + $0xfc] sm:$0xf]
    %v212 = vld [vmem:[%s1] sm:$0xf]
    %v213 = vld [vmem:[%s1 + $0x4] sm:$0xf]
    %v214 = vld [vmem:[%s1 + $0x8] sm:$0xf]
    %v215 = vld [vmem:[%s1 + $0xc] sm:$0xf]
    %v216 = vld [vmem:[%s1 + $0x10] sm:$0xf]
    %v217 = vld [vmem:[%s1 + $0x14] sm:$0xf]
    %v218 = vld [vmem:[%s1 + $0x18] sm:$0xf]
    %v219 = vld [vmem:[%s1 + $0x1c] sm:$0xf]
    %v220 = vld [vmem:[%s1 + $0x20] sm:$0xf]
    %v221 = vld [vmem:[%s1 + $0x24] sm:$0xf]
    %v222 = vld [vmem:[%s1 + $0x28] sm:$0xf]
    %v223 = vld [vmem:[%s1 + $0x2c] sm:$0xf]
    %v224 = vld [vmem:[%s1 + $0x30] sm:$0xf]
    %v225 = vld [vmem:[%s1 + $0x34] sm:$0xf]
    %v226 = vld [vmem:[%s1 + $0x38] sm:$0xf]
    %v227 = vld [vmem:[%s1 + $0x3c] sm:$0xf]
    %v292 = vunpack.c.l.b16 %v148
    %v293 = vunpack.c.l.b16 %v149
    %v294 = vunpack.c.l.b16 %v150
    %v295 = vunpack.c.l.b16 %v151
    %v296 = vunpack.c.l.b16 %v152
    %v297 = vunpack.c.l.b16 %v153
    %v298 = vunpack.c.l.b16 %v154
    %v299 = vunpack.c.l.b16 %v155
    %v300 = vunpack.c.l.b16 %v156
    %v301 = vunpack.c.l.b16 %v157
    %v302 = vunpack.c.l.b16 %v158
    %v303 = vunpack.c.l.b16 %v159
    %v304 = vunpack.c.l.b16 %v160
    %v305 = vunpack.c.l.b16 %v161
    %v306 = vunpack.c.l.b16 %v162
    %v307 = vunpack.c.l.b16 %v163
    %v308 = vunpack.c.l.b16 %v164
    %v309 = vunpack.c.l.b16 %v165
    %v310 = vunpack.c.l.b16 %v166
    %v311 = vunpack.c.l.b16 %v167
    %v312 = vunpack.c.l.b16 %v168
    %v313 = vunpack.c.l.b16 %v169
    %v314 = vunpack.c.l.b16 %v170
    %v315 = vunpack.c.l.b16 %v171
    %v316 = vunpack.c.l.b16 %v172
    %v317 = vunpack.c.l.b16 %v173
    %v318 = vunpack.c.l.b16 %v174
    %v319 = vunpack.c.l.b16 %v175
    %v320 = vunpack.c.l.b16 %v176
    %v321 = vunpack.c.l.b16 %v177
    %v322 = vunpack.c.l.b16 %v178
    %v323 = vunpack.c.l.b16 %v179
    %v324 = vunpack.c.l.b16 %v180
    %v325 = vunpack.c.l.b16 %v181
    %v326 = vunpack.c.l.b16 %v182
    %v327 = vunpack.c.l.b16 %v183
    %v328 = vunpack.c.l.b16 %v184
    %v329 = vunpack.c.l.b16 %v185
    %v330 = vunpack.c.l.b16 %v186
    %v331 = vunpack.c.l.b16 %v187
    %v332 = vunpack.c.l.b16 %v188
    %v333 = vunpack.c.l.b16 %v189
    %v334 = vunpack.c.l.b16 %v190
    %v335 = vunpack.c.l.b16 %v191
    %v336 = vunpack.c.l.b16 %v192
    %v337 = vunpack.c.l.b16 %v193
    %v338 = vunpack.c.l.b16 %v194
    %v339 = vunpack.c.l.b16 %v195
    %v340 = vunpack.c.l.b16 %v196
    %v341 = vunpack.c.l.b16 %v197
    %v342 = vunpack.c.l.b16 %v198
    %v343 = vunpack.c.l.b16 %v199
    %v344 = vunpack.c.l.b16 %v200
    %v345 = vunpack.c.l.b16 %v201
    %v346 = vunpack.c.l.b16 %v202
    %v347 = vunpack.c.l.b16 %v203
    %v348 = vunpack.c.l.b16 %v204
    %v349 = vunpack.c.l.b16 %v205
    %v350 = vunpack.c.l.b16 %v206
    %v351 = vunpack.c.l.b16 %v207
    %v352 = vunpack.c.l.b16 %v208
    %v353 = vunpack.c.l.b16 %v209
    %v354 = vunpack.c.l.b16 %v210
    %v355 = vunpack.c.l.b16 %v211
    %v356 = vpack.c.b16 %v293, %v292
    %v357 = vpack.c.b16 %v295, %v294
    %v358 = vpack.c.b16 %v297, %v296
    %v359 = vpack.c.b16 %v299, %v298
    %v360 = vpack.c.b16 %v301, %v300
    %v361 = vpack.c.b16 %v303, %v302
    %v362 = vpack.c.b16 %v305, %v304
    %v363 = vpack.c.b16 %v307, %v306
    %v364 = vpack.c.b16 %v309, %v308
    %v365 = vpack.c.b16 %v311, %v310
    %v366 = vpack.c.b16 %v313, %v312
    %v367 = vpack.c.b16 %v315, %v314
    %v368 = vpack.c.b16 %v317, %v316
    %v369 = vpack.c.b16 %v319, %v318
    %v370 = vpack.c.b16 %v321, %v320
    %v371 = vpack.c.b16 %v323, %v322
    %v372 = vpack.c.b16 %v325, %v324
    %v373 = vpack.c.b16 %v327, %v326
    %v374 = vpack.c.b16 %v329, %v328
    %v375 = vpack.c.b16 %v331, %v330
    %v376 = vpack.c.b16 %v333, %v332
    %v377 = vpack.c.b16 %v335, %v334
    %v378 = vpack.c.b16 %v337, %v336
    %v379 = vpack.c.b16 %v339, %v338
    %v380 = vpack.c.b16 %v341, %v340
    %v381 = vpack.c.b16 %v343, %v342
    %v382 = vpack.c.b16 %v345, %v344
    %v383 = vpack.c.b16 %v347, %v346
    %v384 = vpack.c.b16 %v349, %v348
    %v385 = vpack.c.b16 %v351, %v350
    %v386 = vpack.c.b16 %v353, %v352
    %v387 = vpack.c.b16 %v355, %v354
    %v436 = vunpack.c.l.b16 %v212
    %v437 = vunpack.c.l.b16 %v213
    %v438 = vunpack.c.l.b16 %v214
    %v439 = vunpack.c.l.b16 %v215
    %v440 = vunpack.c.l.b16 %v216
    %v441 = vunpack.c.l.b16 %v217
    %v442 = vunpack.c.l.b16 %v218
    %v443 = vunpack.c.l.b16 %v219
    %v444 = vunpack.c.l.b16 %v220
    %v445 = vunpack.c.l.b16 %v221
    %v446 = vunpack.c.l.b16 %v222
    %v447 = vunpack.c.l.b16 %v223
    %v448 = vunpack.c.l.b16 %v224
    %v449 = vunpack.c.l.b16 %v225
    %v450 = vunpack.c.l.b16 %v226
    %v451 = vunpack.c.l.b16 %v227
    %v452 = vpack.c.b16 %v437, %v436
    %v453 = vpack.c.b16 %v439, %v438
    %v454 = vpack.c.b16 %v441, %v440
    %v455 = vpack.c.b16 %v443, %v442
    %v456 = vpack.c.b16 %v445, %v444
    %v457 = vpack.c.b16 %v447, %v446
    %v458 = vpack.c.b16 %v449, %v448
    %v459 = vpack.c.b16 %v451, %v450
    %468 = vmatprep.subr.bf16.mxu0 0
    %469 = vmatpush1.bf16.msra.mxu0 %v452
    %470 = vmatprep.subr.bf16.mxu0 0
    %471 = vmatpush1.bf16.msra.mxu0 %v453
    %472 = vmatprep.subr.bf16.mxu0 0
    %473 = vmatpush1.bf16.msra.mxu0 %v454
    %474 = vmatprep.subr.bf16.mxu0 0
    %475 = vmatpush1.bf16.msra.mxu0 %v455
    %476 = vmatprep.subr.bf16.mxu0 0
    %477 = vmatpush1.bf16.msra.mxu0 %v456
    %478 = vmatprep.subr.bf16.mxu0 0
    %479 = vmatpush1.bf16.msra.mxu0 %v457
    %480 = vmatprep.subr.bf16.mxu0 0
    %481 = vmatpush1.bf16.msra.mxu0 %v458
    %482 = vmatprep.subr.bf16.mxu0 0
    %483 = vmatpush1.bf16.msra.mxu0 %v459
    %484 = vmatprep.subr.bf16.mxu0 0
    %485 = vmatpush1.bf16.msra.mxu0 0
    %486 = vmatprep.subr.bf16.mxu0 0
    %487 = vmatpush1.bf16.msra.mxu0 0
    %488 = vmatprep.subr.bf16.mxu0 0
    %489 = vmatpush1.bf16.msra.mxu0 0
    %490 = vmatprep.subr.bf16.mxu0 0
    %491 = vmatpush1.bf16.msra.mxu0 0
    %492 = vmatprep.subr.bf16.mxu0 0
    %493 = vmatpush1.bf16.msra.mxu0 0
    %494 = vmatprep.subr.bf16.mxu0 0
    %495 = vmatpush1.bf16.msra.mxu0 0
    %496 = vmatprep.subr.bf16.mxu0 0
    %497 = vmatpush1.bf16.msra.mxu0 0
    %498 = vmatprep.subr.bf16.mxu0 0
    %499 = vmatpush1.bf16.msra.mxu0 0
    %500 = vmatprep.mubr.bf16.mxu0 0
    %501 = vmatmul.mubr.bf16.gmra.mrb[0].mxu0 %v356
    %v502 = vpop.f32.mrb[0].mxu0
    %v503 = vadd.f32 0.0, %v502
    %v504 = vpop.f32.mrb[0].mxu0
    %v505 = vpop.f32.mrb[0].mxu0
    %v506 = vadd.f32 0.0, %v505
    %v507 = vpop.f32.mrb[0].mxu0
    %508 = vmatprep.mubr.bf16.mxu0 0
    %509 = vmatmul.mubr.bf16.gmra.mrb[0].mxu0 %v357
    %v510 = vpop.f32.mrb[0].mxu0
    %v511 = vadd.f32 0.0, %v510
    %v512 = vpop.f32.mrb[0].mxu0
    %v513 = vpop.f32.mrb[0].mxu0
    %v514 = vadd.f32 0.0, %v513
    %v515 = vpop.f32.mrb[0].mxu0
    %516 = vmatprep.mubr.bf16.mxu0 0
    %517 = vmatmul.mubr.bf16.gmra.mrb[0].mxu0 %v358
    %v518 = vpop.f32.mrb[0].mxu0
    %v519 = vadd.f32 0.0, %v518
    %v520 = vpop.f32.mrb[0].mxu0
    %v521 = vpop.f32.mrb[0].mxu0
    %v522 = vadd.f32 0.0, %v521
    %v523 = vpop.f32.mrb[0].mxu0
    %524 = vmatprep.mubr.bf16.mxu0 0
    %525 = vmatmul.mubr.bf16.gmra.mrb[0].mxu0 %v359
    %v526 = vpop.f32.mrb[0].mxu0
    %v527 = vadd.f32 0.0, %v526
    %v528 = vpop.f32.mrb[0].mxu0
    %v529 = vpop.f32.mrb[0].mxu0
    %v530 = vadd.f32 0.0, %v529
    %v531 = vpop.f32.mrb[0].mxu0
    %532 = vmatprep.mubr.bf16.mxu0 0
    %533 = vmatmul.mubr.bf16.gmra.mrb[0].mxu0 %v360
    %v534 = vpop.f32.mrb[0].mxu0
    %v535 = vadd.f32 0.0, %v534
    %v536 = vpop.f32.mrb[0].mxu0
    %v537 = vpop.f32.mrb[0].mxu0
    %v538 = vadd.f32 0.0, %v537
    %v539 = vpop.f32.mrb[0].mxu0
    %540 = vmatprep.mubr.bf16.mxu0 0
    %541 = vmatmul.mubr.bf16.gmra.mrb[0].mxu0 %v361
    %v542 = vpop.f32.mrb[0].mxu0
    %v543 = vadd.f32 0.0, %v542
    %v544 = vpop.f32.mrb[0].mxu0
    %v545 = vpop.f32.mrb[0].mxu0
    %v546 = vadd.f32 0.0, %v545
    %v547 = vpop.f32.mrb[0].mxu0
    %548 = vmatprep.mubr.bf16.mxu0 0
    %549 = vmatmul.mubr.bf16.gmra.mrb[0].mxu0 %v362
    %v550 = vpop.f32.mrb[0].mxu0
    %v551 = vadd.f32 0.0, %v550
    %v552 = vpop.f32.mrb[0].mxu0
    %v553 = vpop.f32.mrb[0].mxu0
    %v554 = vadd.f32 0.0, %v553
    %v555 = vpop.f32.mrb[0].mxu0
    %556 = vmatprep.mubr.bf16.mxu0 0
    %557 = vmatmul.mubr.bf16.gmra.mrb[0].mxu0 %v363
    %v558 = vpop.f32.mrb[0].mxu0
    %v559 = vadd.f32 0.0, %v558
    %v560 = vpop.f32.mrb[0].mxu0
    %v561 = vpop.f32.mrb[0].mxu0
    %v562 = vadd.f32 0.0, %v561
    %v563 = vpop.f32.mrb[0].mxu0
    %564 = vmatprep.mubr.bf16.mxu0 0
    %565 = vmatmul.mubr.bf16.gmra.mrb[0].mxu0 %v364
    %v566 = vpop.f32.mrb[0].mxu0
    %v567 = vadd.f32 0.0, %v566
    %v568 = vpop.f32.mrb[0].mxu0
    %v569 = vpop.f32.mrb[0].mxu0
    %v570 = vadd.f32 0.0, %v569
    %v571 = vpop.f32.mrb[0].mxu0
    %572 = vmatprep.mubr.bf16.mxu0 0
    %573 = vmatmul.mubr.bf16.gmra.mrb[0].mxu0 %v365
    %v574 = vpop.f32.mrb[0].mxu0
    %v575 = vadd.f32 0.0, %v574
    %v576 = vpop.f32.mrb[0].mxu0
    %v577 = vpop.f32.mrb[0].mxu0
    %v578 = vadd.f32 0.0, %v577
    %v579 = vpop.f32.mrb[0].mxu0
    %580 = vmatprep.mubr.bf16.mxu0 0
    %581 = vmatmul.mubr.bf16.gmra.mrb[0].mxu0 %v366
    %v582 = vpop.f32.mrb[0].mxu0
    %v583 = vadd.f32 0.0, %v582
    %v584 = vpop.f32.mrb[0].mxu0
    %v585 = vpop.f32.mrb[0].mxu0
    %v586 = vadd.f32 0.0, %v585
    %v587 = vpop.f32.mrb[0].mxu0
    %588 = vmatprep.mubr.bf16.mxu0 0
    %589 = vmatmul.mubr.bf16.gmra.mrb[0].mxu0 %v367
    %v590 = vpop.f32.mrb[0].mxu0
    %v591 = vadd.f32 0.0, %v590
    %v592 = vpop.f32.mrb[0].mxu0
    %v593 = vpop.f32.mrb[0].mxu0
    %v594 = vadd.f32 0.0, %v593
    %v595 = vpop.f32.mrb[0].mxu0
    %596 = vmatprep.mubr.bf16.mxu0 0
    %597 = vmatmul.mubr.bf16.gmra.mrb[0].mxu0 %v368
    %v598 = vpop.f32.mrb[0].mxu0
    %v599 = vadd.f32 0.0, %v598
    %v600 = vpop.f32.mrb[0].mxu0
    %v601 = vpop.f32.mrb[0].mxu0
    %v602 = vadd.f32 0.0, %v601
    %v603 = vpop.f32.mrb[0].mxu0
    %604 = vmatprep.mubr.bf16.mxu0 0
    %605 = vmatmul.mubr.bf16.gmra.mrb[0].mxu0 %v369
    %v606 = vpop.f32.mrb[0].mxu0
    %v607 = vadd.f32 0.0, %v606
    %v608 = vpop.f32.mrb[0].mxu0
    %v609 = vpop.f32.mrb[0].mxu0
    %v610 = vadd.f32 0.0, %v609
    %v611 = vpop.f32.mrb[0].mxu0
    %612 = vmatprep.mubr.bf16.mxu0 0
    %613 = vmatmul.mubr.bf16.gmra.mrb[0].mxu0 %v370
    %v614 = vpop.f32.mrb[0].mxu0
    %v615 = vadd.f32 0.0, %v614
    %v616 = vpop.f32.mrb[0].mxu0
    %v617 = vpop.f32.mrb[0].mxu0
    %v618 = vadd.f32 0.0, %v617
    %v619 = vpop.f32.mrb[0].mxu0
    %620 = vmatprep.mubr.bf16.mxu0 0
    %621 = vmatmul.mubr.bf16.gmra.mrb[0].mxu0 %v371
    %v622 = vpop.f32.mrb[0].mxu0
    %v623 = vadd.f32 0.0, %v622
    %v624 = vpop.f32.mrb[0].mxu0
    %v625 = vpop.f32.mrb[0].mxu0
    %v626 = vadd.f32 0.0, %v625
    %v627 = vpop.f32.mrb[0].mxu0
    %628 = vmatprep.mubr.bf16.mxu0 0
    %629 = vmatmul.mubr.bf16.gmra.mrb[0].mxu0 %v372
    %v630 = vpop.f32.mrb[0].mxu0
    %v631 = vadd.f32 0.0, %v630
    %v632 = vpop.f32.mrb[0].mxu0
    %v633 = vpop.f32.mrb[0].mxu0
    %v634 = vadd.f32 0.0, %v633
    %v635 = vpop.f32.mrb[0].mxu0
    %636 = vmatprep.mubr.bf16.mxu0 0
    %637 = vmatmul.mubr.bf16.gmra.mrb[0].mxu0 %v373
    %v638 = vpop.f32.mrb[0].mxu0
    %v639 = vadd.f32 0.0, %v638
    %v640 = vpop.f32.mrb[0].mxu0
    %v641 = vpop.f32.mrb[0].mxu0
    %v642 = vadd.f32 0.0, %v641
    %v643 = vpop.f32.mrb[0].mxu0
    %644 = vmatprep.mubr.bf16.mxu0 0
    %645 = vmatmul.mubr.bf16.gmra.mrb[0].mxu0 %v374
    %v646 = vpop.f32.mrb[0].mxu0
    %v647 = vadd.f32 0.0, %v646
    %v648 = vpop.f32.mrb[0].mxu0
    %v649 = vpop.f32.mrb[0].mxu0
    %v650 = vadd.f32 0.0, %v649
    %v651 = vpop.f32.mrb[0].mxu0
    %652 = vmatprep.mubr.bf16.mxu0 0
    %653 = vmatmul.mubr.bf16.gmra.mrb[0].mxu0 %v375
    %v654 = vpop.f32.mrb[0].mxu0
    %v655 = vadd.f32 0.0, %v654
    %v656 = vpop.f32.mrb[0].mxu0
    %v657 = vpop.f32.mrb[0].mxu0
    %v658 = vadd.f32 0.0, %v657
    %v659 = vpop.f32.mrb[0].mxu0
    %660 = vmatprep.mubr.bf16.mxu0 0
    %661 = vmatmul.mubr.bf16.gmra.mrb[0].mxu0 %v376
    %v662 = vpop.f32.mrb[0].mxu0
    %v663 = vadd.f32 0.0, %v662
    %v664 = vpop.f32.mrb[0].mxu0
    %v665 = vpop.f32.mrb[0].mxu0
    %v666 = vadd.f32 0.0, %v665
    %v667 = vpop.f32.mrb[0].mxu0
    %668 = vmatprep.mubr.bf16.mxu0 0
    %669 = vmatmul.mubr.bf16.gmra.mrb[0].mxu0 %v377
    %v670 = vpop.f32.mrb[0].mxu0
    %v671 = vadd.f32 0.0, %v670
    %v672 = vpop.f32.mrb[0].mxu0
    %v673 = vpop.f32.mrb[0].mxu0
    %v674 = vadd.f32 0.0, %v673
    %v675 = vpop.f32.mrb[0].mxu0
    %676 = vmatprep.mubr.bf16.mxu0 0
    %677 = vmatmul.mubr.bf16.gmra.mrb[0].mxu0 %v378
    %v678 = vpop.f32.mrb[0].mxu0
    %v679 = vadd.f32 0.0, %v678
    %v680 = vpop.f32.mrb[0].mxu0
    %v681 = vpop.f32.mrb[0].mxu0
    %v682 = vadd.f32 0.0, %v681
    %v683 = vpop.f32.mrb[0].mxu0
    %684 = vmatprep.mubr.bf16.mxu0 0
    %685 = vmatmul.mubr.bf16.gmra.mrb[0].mxu0 %v379
    %v686 = vpop.f32.mrb[0].mxu0
    %v687 = vadd.f32 0.0, %v686
    %v688 = vpop.f32.mrb[0].mxu0
    %v689 = vpop.f32.mrb[0].mxu0
    %v690 = vadd.f32 0.0, %v689
    %v691 = vpop.f32.mrb[0].mxu0
    %692 = vmatprep.mubr.bf16.mxu0 0
    %693 = vmatmul.mubr.bf16.gmra.mrb[0].mxu0 %v380
    %v694 = vpop.f32.mrb[0].mxu0
    %v695 = vadd.f32 0.0, %v694
    %v696 = vpop.f32.mrb[0].mxu0
    %v697 = vpop.f32.mrb[0].mxu0
    %v698 = vadd.f32 0.0, %v697
    %v699 = vpop.f32.mrb[0].mxu0
    %700 = vmatprep.mubr.bf16.mxu0 0
    %701 = vmatmul.mubr.bf16.gmra.mrb[0].mxu0 %v381
    %v702 = vpop.f32.mrb[0].mxu0
    %v703 = vadd.f32 0.0, %v702
    %v704 = vpop.f32.mrb[0].mxu0
    %v705 = vpop.f32.mrb[0].mxu0
    %v706 = vadd.f32 0.0, %v705
    %v707 = vpop.f32.mrb[0].mxu0
    %708 = vmatprep.mubr.bf16.mxu0 0
    %709 = vmatmul.mubr.bf16.gmra.mrb[0].mxu0 %v382
    %v710 = vpop.f32.mrb[0].mxu0
    %v711 = vadd.f32 0.0, %v710
    %v712 = vpop.f32.mrb[0].mxu0
    %v713 = vpop.f32.mrb[0].mxu0
    %v714 = vadd.f32 0.0, %v713
    %v715 = vpop.f32.mrb[0].mxu0
    %716 = vmatprep.mubr.bf16.mxu0 0
    %717 = vmatmul.mubr.bf16.gmra.mrb[0].mxu0 %v383
    %v718 = vpop.f32.mrb[0].mxu0
    %v719 = vadd.f32 0.0, %v718
    %v720 = vpop.f32.mrb[0].mxu0
    %v721 = vpop.f32.mrb[0].mxu0
    %v722 = vadd.f32 0.0, %v721
    %v723 = vpop.f32.mrb[0].mxu0
    %724 = vmatprep.mubr.bf16.mxu0 0
    %725 = vmatmul.mubr.bf16.gmra.mrb[0].mxu0 %v384
    %v726 = vpop.f32.mrb[0].mxu0
    %v727 = vadd.f32 0.0, %v726
    %v728 = vpop.f32.mrb[0].mxu0
    %v729 = vpop.f32.mrb[0].mxu0
    %v730 = vadd.f32 0.0, %v729
    %v731 = vpop.f32.mrb[0].mxu0
    %732 = vmatprep.mubr.bf16.mxu0 0
    %733 = vmatmul.mubr.bf16.gmra.mrb[0].mxu0 %v385
    %v734 = vpop.f32.mrb[0].mxu0
    %v735 = vadd.f32 0.0, %v734
    %v736 = vpop.f32.mrb[0].mxu0
    %v737 = vpop.f32.mrb[0].mxu0
    %v738 = vadd.f32 0.0, %v737
    %v739 = vpop.f32.mrb[0].mxu0
    %740 = vmatprep.mubr.bf16.mxu0 0
    %741 = vmatmul.mubr.bf16.gmra.mrb[0].mxu0 %v386
    %v742 = vpop.f32.mrb[0].mxu0
    %v743 = vadd.f32 0.0, %v742
    %v744 = vpop.f32.mrb[0].mxu0
    %v745 = vpop.f32.mrb[0].mxu0
    %v746 = vadd.f32 0.0, %v745
    %v747 = vpop.f32.mrb[0].mxu0
    %748 = vmatprep.mubr.bf16.mxu0 0
    %749 = vmatmul.mubr.bf16.gmra.mrb[0].mxu0 %v387
    %v750 = vpop.f32.mrb[0].mxu0
    %v751 = vadd.f32 0.0, %v750
    %v752 = vpop.f32.mrb[0].mxu0
    %v753 = vpop.f32.mrb[0].mxu0
    %v754 = vadd.f32 0.0, %v753
    %v755 = vpop.f32.mrb[0].mxu0
    %756 = vdwg.mxu0
    %v757 = vadd.f32 %v84, %v503
    %v758 = vadd.f32 %v85, %v506
    %v759 = vadd.f32 %v86, %v511
    %v760 = vadd.f32 %v87, %v514
    %v761 = vadd.f32 %v88, %v519
    %v762 = vadd.f32 %v89, %v522
    %v763 = vadd.f32 %v90, %v527
    %v764 = vadd.f32 %v91, %v530
    %v765 = vadd.f32 %v92, %v535
    %v766 = vadd.f32 %v93, %v538
    %v767 = vadd.f32 %v94, %v543
    %v768 = vadd.f32 %v95, %v546
    %v769 = vadd.f32 %v96, %v551
    %v770 = vadd.f32 %v97, %v554
    %v771 = vadd.f32 %v98, %v559
    %v772 = vadd.f32 %v99, %v562
    %v773 = vadd.f32 %v100, %v567
    %v774 = vadd.f32 %v101, %v570
    %v775 = vadd.f32 %v102, %v575
    %v776 = vadd.f32 %v103, %v578
    %v777 = vadd.f32 %v104, %v583
    %v778 = vadd.f32 %v105, %v586
    %v779 = vadd.f32 %v106, %v591
    %v780 = vadd.f32 %v107, %v594
    %v781 = vadd.f32 %v108, %v599
    %v782 = vadd.f32 %v109, %v602
    %v783 = vadd.f32 %v110, %v607
    %v784 = vadd.f32 %v111, %v610
    %v785 = vadd.f32 %v112, %v615
    %v786 = vadd.f32 %v113, %v618
    %v787 = vadd.f32 %v114, %v623
    %v788 = vadd.f32 %v115, %v626
    %v789 = vadd.f32 %v116, %v631
    %v790 = vadd.f32 %v117, %v634
    %v791 = vadd.f32 %v118, %v639
    %v792 = vadd.f32 %v119, %v642
    %v793 = vadd.f32 %v120, %v647
    %v794 = vadd.f32 %v121, %v650
    %v795 = vadd.f32 %v122, %v655
    %v796 = vadd.f32 %v123, %v658
    %v797 = vadd.f32 %v124, %v663
    %v798 = vadd.f32 %v125, %v666
    %v799 = vadd.f32 %v126, %v671
    %v800 = vadd.f32 %v127, %v674
    %v801 = vadd.f32 %v128, %v679
    %v802 = vadd.f32 %v129, %v682
    %v803 = vadd.f32 %v130, %v687
    %v804 = vadd.f32 %v131, %v690
    %v805 = vadd.f32 %v132, %v695
    %v806 = vadd.f32 %v133, %v698
    %v807 = vadd.f32 %v134, %v703
    %v808 = vadd.f32 %v135, %v706
    %v809 = vadd.f32 %v136, %v711
    %v810 = vadd.f32 %v137, %v714
    %v811 = vadd.f32 %v138, %v719
    %v812 = vadd.f32 %v139, %v722
    %v813 = vadd.f32 %v140, %v727
    %v814 = vadd.f32 %v141, %v730
    %v815 = vadd.f32 %v142, %v735
    %v816 = vadd.f32 %v143, %v738
    %v817 = vadd.f32 %v144, %v743
    %v818 = vadd.f32 %v145, %v746
    %v819 = vadd.f32 %v146, %v751
    %v820 = vadd.f32 %v147, %v754
    %821 = vst [vmem:[#allocation2] sm:$0xff] %v757
    %822 = vst [vmem:[#allocation2 + $0x8] sm:$0xff] %v758
    %823 = vst [vmem:[#allocation2 + $0x10] sm:$0xff] %v759
    %824 = vst [vmem:[#allocation2 + $0x18] sm:$0xff] %v760
    %825 = vst [vmem:[#allocation2 + $0x20] sm:$0xff] %v761
    %826 = vst [vmem:[#allocation2 + $0x28] sm:$0xff] %v762
    %827 = vst [vmem:[#allocation2 + $0x30] sm:$0xff] %v763
    %828 = vst [vmem:[#allocation2 + $0x38] sm:$0xff] %v764
    %829 = vst [vmem:[#allocation2 + $0x40] sm:$0xff] %v765
    %830 = vst [vmem:[#allocation2 + $0x48] sm:$0xff] %v766
    %831 = vst [vmem:[#allocation2 + $0x50] sm:$0xff] %v767
    %832 = vst [vmem:[#allocation2 + $0x58] sm:$0xff] %v768
    %833 = vst [vmem:[#allocation2 + $0x60] sm:$0xff] %v769
    %834 = vst [vmem:[#allocation2 + $0x68] sm:$0xff] %v770
    %835 = vst [vmem:[#allocation2 + $0x70] sm:$0xff] %v771
    %836 = vst [vmem:[#allocation2 + $0x78] sm:$0xff] %v772
    %837 = vst [vmem:[#allocation2 + $0x80] sm:$0xff] %v773
    %838 = vst [vmem:[#allocation2 + $0x88] sm:$0xff] %v774
    %839 = vst [vmem:[#allocation2 + $0x90] sm:$0xff] %v775
    %840 = vst [vmem:[#allocation2 + $0x98] sm:$0xff] %v776
    %841 = vst [vmem:[#allocation2 + $0xa0] sm:$0xff] %v777
    %842 = vst [vmem:[#allocation2 + $0xa8] sm:$0xff] %v778
    %843 = vst [vmem:[#allocation2 + $0xb0] sm:$0xff] %v779
    %844 = vst [vmem:[#allocation2 + $0xb8] sm:$0xff] %v780
    %845 = vst [vmem:[#allocation2 + $0xc0] sm:$0xff] %v781
    %846 = vst [vmem:[#allocation2 + $0xc8] sm:$0xff] %v782
    %847 = vst [vmem:[#allocation2 + $0xd0] sm:$0xff] %v783
    %848 = vst [vmem:[#allocation2 + $0xd8] sm:$0xff] %v784
    %849 = vst [vmem:[#allocation2 + $0xe0] sm:$0xff] %v785
    %850 = vst [vmem:[#allocation2 + $0xe8] sm:$0xff] %v786
    %851 = vst [vmem:[#allocation2 + $0xf0] sm:$0xff] %v787
    %852 = vst [vmem:[#allocation2 + $0xf8] sm:$0xff] %v788
    %853 = vst [vmem:[#allocation2 + $0x100] sm:$0xff] %v789
    %854 = vst [vmem:[#allocation2 + $0x108] sm:$0xff] %v790
    %855 = vst [vmem:[#allocation2 + $0x110] sm:$0xff] %v791
    %856 = vst [vmem:[#allocation2 + $0x118] sm:$0xff] %v792
    %857 = vst [vmem:[#allocation2 + $0x120] sm:$0xff] %v793
    %858 = vst [vmem:[#allocation2 + $0x128] sm:$0xff] %v794
    %859 = vst [vmem:[#allocation2 + $0x130] sm:$0xff] %v795
    %860 = vst [vmem:[#allocation2 + $0x138] sm:$0xff] %v796
    %861 = vst [vmem:[#allocation2 + $0x140] sm:$0xff] %v797
    %862 = vst [vmem:[#allocation2 + $0x148] sm:$0xff] %v798
    %863 = vst [vmem:[#allocation2 + $0x150] sm:$0xff] %v799
    %864 = vst [vmem:[#allocation2 + $0x158] sm:$0xff] %v800
    %865 = vst [vmem:[#allocation2 + $0x160] sm:$0xff] %v801
    %866 = vst [vmem:[#allocation2 + $0x168] sm:$0xff] %v802
    %867 = vst [vmem:[#allocation2 + $0x170] sm:$0xff] %v803
    %868 = vst [vmem:[#allocation2 + $0x178] sm:$0xff] %v804
    %869 = vst [vmem:[#allocation2 + $0x180] sm:$0xff] %v805
    %870 = vst [vmem:[#allocation2 + $0x188] sm:$0xff] %v806
    %871 = vst [vmem:[#allocation2 + $0x190] sm:$0xff] %v807
    %872 = vst [vmem:[#allocation2 + $0x198] sm:$0xff] %v808
    %873 = vst [vmem:[#allocation2 + $0x1a0] sm:$0xff] %v809
    %874 = vst [vmem:[#allocation2 + $0x1a8] sm:$0xff] %v810
    %875 = vst [vmem:[#allocation2 + $0x1b0] sm:$0xff] %v811
    %876 = vst [vmem:[#allocation2 + $0x1b8] sm:$0xff] %v812
    %877 = vst [vmem:[#allocation2 + $0x1c0] sm:$0xff] %v813
    %878 = vst [vmem:[#allocation2 + $0x1c8] sm:$0xff] %v814
    %879 = vst [vmem:[#allocation2 + $0x1d0] sm:$0xff] %v815
    %880 = vst [vmem:[#allocation2 + $0x1d8] sm:$0xff] %v816
    %881 = vst [vmem:[#allocation2 + $0x1e0] sm:$0xff] %v817
    %882 = vst [vmem:[#allocation2 + $0x1e8] sm:$0xff] %v818
    %883 = vst [vmem:[#allocation2 + $0x1f0] sm:$0xff] %v819
    %884 = vst [vmem:[#allocation2 + $0x1f8] sm:$0xff] %v820
    // Predicated region
    $region18: #{conv_dense.1} parent=1 // pred_check
      %p885 = pneg %p16
    $region19: #{conv_dense.1} parent=1 // pred_check_branch
      %887 = sbr.rel (%p885) target = $region21
    $region20: #{conv_dense.1} parent=1 // pred_region
      %v888 = vld [vmem:[#allocation2] sm:$0xff]
      %v889 = vld [vmem:[#allocation2 + $0x8] sm:$0xff]
      %v890 = vld [vmem:[#allocation2 + $0x10] sm:$0xff]
      %v891 = vld [vmem:[#allocation2 + $0x18] sm:$0xff]
      %v892 = vld [vmem:[#allocation2 + $0x20] sm:$0xff]
      %v893 = vld [vmem:[#allocation2 + $0x28] sm:$0xff]
      %v894 = vld [vmem:[#allocation2 + $0x30] sm:$0xff]
      %v895 = vld [vmem:[#allocation2 + $0x38] sm:$0xff]
      %v896 = vld [vmem:[#allocation2 + $0x40] sm:$0xff]
      %v897 = vld [vmem:[#allocation2 + $0x48] sm:$0xff]
      %v898 = vld [vmem:[#allocation2 + $0x50] sm:$0xff]
      %v899 = vld [vmem:[#allocation2 + $0x58] sm:$0xff]
      %v900 = vld [vmem:[#allocation2 + $0x60] sm:$0xff]
      %v901 = vld [vmem:[#allocation2 + $0x68] sm:$0xff]
      %v902 = vld [vmem:[#allocation2 + $0x70] sm:$0xff]
      %v903 = vld [vmem:[#allocation2 + $0x78] sm:$0xff]
      %v904 = vld [vmem:[#allocation2 + $0x80] sm:$0xff]
      %v905 = vld [vmem:[#allocation2 + $0x88] sm:$0xff]
      %v906 = vld [vmem:[#allocation2 + $0x90] sm:$0xff]
      %v907 = vld [vmem:[#allocation2 + $0x98] sm:$0xff]
      %v908 = vld [vmem:[#allocation2 + $0xa0] sm:$0xff]
      %v909 = vld [vmem:[#allocation2 + $0xa8] sm:$0xff]
      %v910 = vld [vmem:[#allocation2 + $0xb0] sm:$0xff]
      %v911 = vld [vmem:[#allocation2 + $0xb8] sm:$0xff]
      %v912 = vld [vmem:[#allocation2 + $0xc0] sm:$0xff]
      %v913 = vld [vmem:[#allocation2 + $0xc8] sm:$0xff]
      %v914 = vld [vmem:[#allocation2 + $0xd0] sm:$0xff]
      %v915 = vld [vmem:[#allocation2 + $0xd8] sm:$0xff]
      %v916 = vld [vmem:[#allocation2 + $0xe0] sm:$0xff]
      %v917 = vld [vmem:[#allocation2 + $0xe8] sm:$0xff]
      %v918 = vld [vmem:[#allocation2 + $0xf0] sm:$0xff]
      %v919 = vld [vmem:[#allocation2 + $0xf8] sm:$0xff]
      %v920 = vld [vmem:[#allocation2 + $0x100] sm:$0xff]
      %v921 = vld [vmem:[#allocation2 + $0x108] sm:$0xff]
      %v922 = vld [vmem:[#allocation2 + $0x110] sm:$0xff]
      %v923 = vld [vmem:[#allocation2 + $0x118] sm:$0xff]
      %v924 = vld [vmem:[#allocation2 + $0x120] sm:$0xff]
      %v925 = vld [vmem:[#allocation2 + $0x128] sm:$0xff]
      %v926 = vld [vmem:[#allocation2 + $0x130] sm:$0xff]
      %v927 = vld [vmem:[#allocation2 + $0x138] sm:$0xff]
      %v928 = vld [vmem:[#allocation2 + $0x140] sm:$0xff]
      %v929 = vld [vmem:[#allocation2 + $0x148] sm:$0xff]
      %v930 = vld [vmem:[#allocation2 + $0x150] sm:$0xff]
      %v931 = vld [vmem:[#allocation2 + $0x158] sm:$0xff]
      %v932 = vld [vmem:[#allocation2 + $0x160] sm:$0xff]
      %v933 = vld [vmem:[#allocation2 + $0x168] sm:$0xff]
      %v934 = vld [vmem:[#allocation2 + $0x170] sm:$0xff]
      %v935 = vld [vmem:[#allocation2 + $0x178] sm:$0xff]
      %v936 = vld [vmem:[#allocation2 + $0x180] sm:$0xff]
      %v937 = vld [vmem:[#allocation2 + $0x188] sm:$0xff]
      %v938 = vld [vmem:[#allocation2 + $0x190] sm:$0xff]
      %v939 = vld [vmem:[#allocation2 + $0x198] sm:$0xff]
      %v940 = vld [vmem:[#allocation2 + $0x1a0] sm:$0xff]
      %v941 = vld [vmem:[#allocation2 + $0x1a8] sm:$0xff]
      %v942 = vld [vmem:[#allocation2 + $0x1b0] sm:$0xff]
      %v943 = vld [vmem:[#allocation2 + $0x1b8] sm:$0xff]
      %v944 = vld [vmem:[#allocation2 + $0x1c0] sm:$0xff]
      %v945 = vld [vmem:[#allocation2 + $0x1c8] sm:$0xff]
      %v946 = vld [vmem:[#allocation2 + $0x1d0] sm:$0xff]
      %v947 = vld [vmem:[#allocation2 + $0x1d8] sm:$0xff]
      %v948 = vld [vmem:[#allocation2 + $0x1e0] sm:$0xff]
      %v949 = vld [vmem:[#allocation2 + $0x1e8] sm:$0xff]
      %v950 = vld [vmem:[#allocation2 + $0x1f0] sm:$0xff]
      %v951 = vld [vmem:[#allocation2 + $0x1f8] sm:$0xff]
      %v952 = vld [vmem:[%s2] sm:$0x1]
      %v954 = vlaneseq
      %v955 = vshrl.u32 %v954, 7
      %v956 = vsub.s32 0, %v955
      %v957 = vrot.slane %v952, %v956
      %v959 = vadd.f32 %v888, %v957
      %v960 = vadd.f32 %v889, %v957
      %v961 = vadd.f32 %v890, %v957
      %v962 = vadd.f32 %v891, %v957
      %v963 = vadd.f32 %v892, %v957
      %v964 = vadd.f32 %v893, %v957
      %v965 = vadd.f32 %v894, %v957
      %v966 = vadd.f32 %v895, %v957
      %v967 = vadd.f32 %v896, %v957
      %v968 = vadd.f32 %v897, %v957
      %v969 = vadd.f32 %v898, %v957
      %v970 = vadd.f32 %v899, %v957
      %v971 = vadd.f32 %v900, %v957
      %v972 = vadd.f32 %v901, %v957
      %v973 = vadd.f32 %v902, %v957
      %v974 = vadd.f32 %v903, %v957
      %v975 = vadd.f32 %v904, %v957
      %v976 = vadd.f32 %v905, %v957
      %v977 = vadd.f32 %v906, %v957
      %v978 = vadd.f32 %v907, %v957
      %v979 = vadd.f32 %v908, %v957
      %v980 = vadd.f32 %v909, %v957
      %v981 = vadd.f32 %v910, %v957
      %v982 = vadd.f32 %v911, %v957
      %v983 = vadd.f32 %v912, %v957
      %v984 = vadd.f32 %v913, %v957
      %v985 = vadd.f32 %v914, %v957
      %v986 = vadd.f32 %v915, %v957
      %v987 = vadd.f32 %v916, %v957
      %v988 = vadd.f32 %v917, %v957
      %v989 = vadd.f32 %v918, %v957
      %v990 = vadd.f32 %v919, %v957
      %v991 = vadd.f32 %v920, %v957
      %v992 = vadd.f32 %v921, %v957
      %v993 = vadd.f32 %v922, %v957
      %v994 = vadd.f32 %v923, %v957
      %v995 = vadd.f32 %v924, %v957
      %v996 = vadd.f32 %v925, %v957
      %v997 = vadd.f32 %v926, %v957
      %v998 = vadd.f32 %v927, %v957
      %v999 = vadd.f32 %v928, %v957
      %v1000 = vadd.f32 %v929, %v957
      %v1001 = vadd.f32 %v930, %v957
      %v1002 = vadd.f32 %v931, %v957
      %v1003 = vadd.f32 %v932, %v957
      %v1004 = vadd.f32 %v933, %v957
      %v1005 = vadd.f32 %v934, %v957
      %v1006 = vadd.f32 %v935, %v957
      %v1007 = vadd.f32 %v936, %v957
      %v1008 = vadd.f32 %v937, %v957
      %v1009 = vadd.f32 %v938, %v957
      %v1010 = vadd.f32 %v939, %v957
      %v1011 = vadd.f32 %v940, %v957
      %v1012 = vadd.f32 %v941, %v957
      %v1013 = vadd.f32 %v942, %v957
      %v1014 = vadd.f32 %v943, %v957
      %v1015 = vadd.f32 %v944, %v957
      %v1016 = vadd.f32 %v945, %v957
      %v1017 = vadd.f32 %v946, %v957
      %v1018 = vadd.f32 %v947, %v957
      %v1019 = vadd.f32 %v948, %v957
      %v1020 = vadd.f32 %v949, %v957
      %v1021 = vadd.f32 %v950, %v957
      %v1022 = vadd.f32 %v951, %v957
      %v1023 = vmax.f32 %v959, 0.0
      %v1024 = vmax.f32 %v960, 0.0
      %v1025 = vmax.f32 %v961, 0.0
      %v1026 = vmax.f32 %v962, 0.0
      %v1027 = vmax.f32 %v963, 0.0
      %v1028 = vmax.f32 %v964, 0.0
      %v1029 = vmax.f32 %v965, 0.0
      %v1030 = vmax.f32 %v966, 0.0
      %v1031 = vmax.f32 %v967, 0.0
      %v1032 = vmax.f32 %v968, 0.0
      %v1033 = vmax.f32 %v969, 0.0
      %v1034 = vmax.f32 %v970, 0.0
      %v1035 = vmax.f32 %v971, 0.0
      %v1036 = vmax.f32 %v972, 0.0
      %v1037 = vmax.f32 %v973, 0.0
      %v1038 = vmax.f32 %v974, 0.0
      %v1039 = vmax.f32 %v975, 0.0
      %v1040 = vmax.f32 %v976, 0.0
      %v1041 = vmax.f32 %v977, 0.0
      %v1042 = vmax.f32 %v978, 0.0
      %v1043 = vmax.f32 %v979, 0.0
      %v1044 = vmax.f32 %v980, 0.0
      %v1045 = vmax.f32 %v981, 0.0
      %v1046 = vmax.f32 %v982, 0.0
      %v1047 = vmax.f32 %v983, 0.0
      %v1048 = vmax.f32 %v984, 0.0
      %v1049 = vmax.f32 %v985, 0.0
      %v1050 = vmax.f32 %v986, 0.0
      %v1051 = vmax.f32 %v987, 0.0
      %v1052 = vmax.f32 %v988, 0.0
      %v1053 = vmax.f32 %v989, 0.0
      %v1054 = vmax.f32 %v990, 0.0
      %v1055 = vmax.f32 %v991, 0.0
      %v1056 = vmax.f32 %v992, 0.0
      %v1057 = vmax.f32 %v993, 0.0
      %v1058 = vmax.f32 %v994, 0.0
      %v1059 = vmax.f32 %v995, 0.0
      %v1060 = vmax.f32 %v996, 0.0
      %v1061 = vmax.f32 %v997, 0.0
      %v1062 = vmax.f32 %v998, 0.0
      %v1063 = vmax.f32 %v999, 0.0
      %v1064 = vmax.f32 %v1000, 0.0
      %v1065 = vmax.f32 %v1001, 0.0
      %v1066 = vmax.f32 %v1002, 0.0
      %v1067 = vmax.f32 %v1003, 0.0
      %v1068 = vmax.f32 %v1004, 0.0
      %v1069 = vmax.f32 %v1005, 0.0
      %v1070 = vmax.f32 %v1006, 0.0
      %v1071 = vmax.f32 %v1007, 0.0
      %v1072 = vmax.f32 %v1008, 0.0
      %v1073 = vmax.f32 %v1009, 0.0
      %v1074 = vmax.f32 %v1010, 0.0
      %v1075 = vmax.f32 %v1011, 0.0
      %v1076 = vmax.f32 %v1012, 0.0
      %v1077 = vmax.f32 %v1013, 0.0
      %v1078 = vmax.f32 %v1014, 0.0
      %v1079 = vmax.f32 %v1015, 0.0
      %v1080 = vmax.f32 %v1016, 0.0
      %v1081 = vmax.f32 %v1017, 0.0
      %v1082 = vmax.f32 %v1018, 0.0
      %v1083 = vmax.f32 %v1019, 0.0
      %v1084 = vmax.f32 %v1020, 0.0
      %v1085 = vmax.f32 %v1021, 0.0
      %v1086 = vmax.f32 %v1022, 0.0
      %v1087 = vpack.c.bf16 %v1024, %v1023
      %v1088 = vpack.c.bf16 %v1026, %v1025
      %v1089 = vpack.c.bf16 %v1028, %v1027
      %v1090 = vpack.c.bf16 %v1030, %v1029
      %v1091 = vpack.c.bf16 %v1032, %v1031
      %v1092 = vpack.c.bf16 %v1034, %v1033
      %v1093 = vpack.c.bf16 %v1036, %v1035
      %v1094 = vpack.c.bf16 %v1038, %v1037
      %v1095 = vpack.c.bf16 %v1040, %v1039
      %v1096 = vpack.c.bf16 %v1042, %v1041
      %v1097 = vpack.c.bf16 %v1044, %v1043
      %v1098 = vpack.c.bf16 %v1046, %v1045
      %v1099 = vpack.c.bf16 %v1048, %v1047
      %v1100 = vpack.c.bf16 %v1050, %v1049
      %v1101 = vpack.c.bf16 %v1052, %v1051
      %v1102 = vpack.c.bf16 %v1054, %v1053
      %v1103 = vpack.c.bf16 %v1056, %v1055
      %v1104 = vpack.c.bf16 %v1058, %v1057
      %v1105 = vpack.c.bf16 %v1060, %v1059
      %v1106 = vpack.c.bf16 %v1062, %v1061
      %v1107 = vpack.c.bf16 %v1064, %v1063
      %v1108 = vpack.c.bf16 %v1066, %v1065
      %v1109 = vpack.c.bf16 %v1068, %v1067
      %v1110 = vpack.c.bf16 %v1070, %v1069
      %v1111 = vpack.c.bf16 %v1072, %v1071
      %v1112 = vpack.c.bf16 %v1074, %v1073
      %v1113 = vpack.c.bf16 %v1076, %v1075
      %v1114 = vpack.c.bf16 %v1078, %v1077
      %v1115 = vpack.c.bf16 %v1080, %v1079
      %v1116 = vpack.c.bf16 %v1082, %v1081
      %v1117 = vpack.c.bf16 %v1084, %v1083
      %v1118 = vpack.c.bf16 %v1086, %v1085
      %v1151 = vunpack.c.l.b16 %v1087
      %v1152 = vunpack.c.h.b16 %v1087
      %v1153 = vunpack.c.l.b16 %v1088
      %v1154 = vunpack.c.h.b16 %v1088
      %v1155 = vunpack.c.l.b16 %v1089
      %v1156 = vunpack.c.h.b16 %v1089
      %v1157 = vunpack.c.l.b16 %v1090
      %v1158 = vunpack.c.h.b16 %v1090
      %v1159 = vunpack.c.l.b16 %v1091
      %v1160 = vunpack.c.h.b16 %v1091
      %v1161 = vunpack.c.l.b16 %v1092
      %v1162 = vunpack.c.h.b16 %v1092
      %v1163 = vunpack.c.l.b16 %v1093
      %v1164 = vunpack.c.h.b16 %v1093
      %v1165 = vunpack.c.l.b16 %v1094
      %v1166 = vunpack.c.h.b16 %v1094
      %v1167 = vunpack.c.l.b16 %v1095
      %v1168 = vunpack.c.h.b16 %v1095
      %v1169 = vunpack.c.l.b16 %v1096
      %v1170 = vunpack.c.h.b16 %v1096
      %v1171 = vunpack.c.l.b16 %v1097
      %v1172 = vunpack.c.h.b16 %v1097
      %v1173 = vunpack.c.l.b16 %v1098
      %v1174 = vunpack.c.h.b16 %v1098
      %v1175 = vunpack.c.l.b16 %v1099
      %v1176 = vunpack.c.h.b16 %v1099
      %v1177 = vunpack.c.l.b16 %v1100
      %v1178 = vunpack.c.h.b16 %v1100
      %v1179 = vunpack.c.l.b16 %v1101
      %v1180 = vunpack.c.h.b16 %v1101
      %v1181 = vunpack.c.l.b16 %v1102
      %v1182 = vunpack.c.h.b16 %v1102
      %v1183 = vunpack.c.l.b16 %v1103
      %v1184 = vunpack.c.h.b16 %v1103
      %v1185 = vunpack.c.l.b16 %v1104
      %v1186 = vunpack.c.h.b16 %v1104
      %v1187 = vunpack.c.l.b16 %v1105
      %v1188 = vunpack.c.h.b16 %v1105
      %v1189 = vunpack.c.l.b16 %v1106
      %v1190 = vunpack.c.h.b16 %v1106
      %v1191 = vunpack.c.l.b16 %v1107
      %v1192 = vunpack.c.h.b16 %v1107
      %v1193 = vunpack.c.l.b16 %v1108
      %v1194 = vunpack.c.h.b16 %v1108
      %v1195 = vunpack.c.l.b16 %v1109
      %v1196 = vunpack.c.h.b16 %v1109
      %v1197 = vunpack.c.l.b16 %v1110
      %v1198 = vunpack.c.h.b16 %v1110
      %v1199 = vunpack.c.l.b16 %v1111
      %v1200 = vunpack.c.h.b16 %v1111
      %v1201 = vunpack.c.l.b16 %v1112
      %v1202 = vunpack.c.h.b16 %v1112
      %v1203 = vunpack.c.l.b16 %v1113
      %v1204 = vunpack.c.h.b16 %v1113
      %v1205 = vunpack.c.l.b16 %v1114
      %v1206 = vunpack.c.h.b16 %v1114
      %v1207 = vunpack.c.l.b16 %v1115
      %v1208 = vunpack.c.h.b16 %v1115
      %v1209 = vunpack.c.l.b16 %v1116
      %v1210 = vunpack.c.h.b16 %v1116
      %v1211 = vunpack.c.l.b16 %v1117
      %v1212 = vunpack.c.h.b16 %v1117
      %v1213 = vunpack.c.l.b16 %v1118
      %v1214 = vunpack.c.h.b16 %v1118
      %v1215 = vpack.c.b16 %v1151, %v1151
      %v1216 = vpack.c.b16 %v1152, %v1152
      %v1217 = vpack.c.b16 %v1153, %v1153
      %v1218 = vpack.c.b16 %v1154, %v1154
      %v1219 = vpack.c.b16 %v1155, %v1155
      %v1220 = vpack.c.b16 %v1156, %v1156
      %v1221 = vpack.c.b16 %v1157, %v1157
      %v1222 = vpack.c.b16 %v1158, %v1158
      %v1223 = vpack.c.b16 %v1159, %v1159
      %v1224 = vpack.c.b16 %v1160, %v1160
      %v1225 = vpack.c.b16 %v1161, %v1161
      %v1226 = vpack.c.b16 %v1162, %v1162
      %v1227 = vpack.c.b16 %v1163, %v1163
      %v1228 = vpack.c.b16 %v1164, %v1164
      %v1229 = vpack.c.b16 %v1165, %v1165
      %v1230 = vpack.c.b16 %v1166, %v1166
      %v1231 = vpack.c.b16 %v1167, %v1167
      %v1232 = vpack.c.b16 %v1168, %v1168
      %v1233 = vpack.c.b16 %v1169, %v1169
      %v1234 = vpack.c.b16 %v1170, %v1170
      %v1235 = vpack.c.b16 %v1171, %v1171
      %v1236 = vpack.c.b16 %v1172, %v1172
      %v1237 = vpack.c.b16 %v1173, %v1173
      %v1238 = vpack.c.b16 %v1174, %v1174
      %v1239 = vpack.c.b16 %v1175, %v1175
      %v1240 = vpack.c.b16 %v1176, %v1176
      %v1241 = vpack.c.b16 %v1177, %v1177
      %v1242 = vpack.c.b16 %v1178, %v1178
      %v1243 = vpack.c.b16 %v1179, %v1179
      %v1244 = vpack.c.b16 %v1180, %v1180
      %v1245 = vpack.c.b16 %v1181, %v1181
      %v1246 = vpack.c.b16 %v1182, %v1182
      %v1247 = vpack.c.b16 %v1183, %v1183
      %v1248 = vpack.c.b16 %v1184, %v1184
      %v1249 = vpack.c.b16 %v1185, %v1185
      %v1250 = vpack.c.b16 %v1186, %v1186
      %v1251 = vpack.c.b16 %v1187, %v1187
      %v1252 = vpack.c.b16 %v1188, %v1188
      %v1253 = vpack.c.b16 %v1189, %v1189
      %v1254 = vpack.c.b16 %v1190, %v1190
      %v1255 = vpack.c.b16 %v1191, %v1191
      %v1256 = vpack.c.b16 %v1192, %v1192
      %v1257 = vpack.c.b16 %v1193, %v1193
      %v1258 = vpack.c.b16 %v1194, %v1194
      %v1259 = vpack.c.b16 %v1195, %v1195
      %v1260 = vpack.c.b16 %v1196, %v1196
      %v1261 = vpack.c.b16 %v1197, %v1197
      %v1262 = vpack.c.b16 %v1198, %v1198
      %v1263 = vpack.c.b16 %v1199, %v1199
      %v1264 = vpack.c.b16 %v1200, %v1200
      %v1265 = vpack.c.b16 %v1201, %v1201
      %v1266 = vpack.c.b16 %v1202, %v1202
      %v1267 = vpack.c.b16 %v1203, %v1203
      %v1268 = vpack.c.b16 %v1204, %v1204
      %v1269 = vpack.c.b16 %v1205, %v1205
      %v1270 = vpack.c.b16 %v1206, %v1206
      %v1271 = vpack.c.b16 %v1207, %v1207
      %v1272 = vpack.c.b16 %v1208, %v1208
      %v1273 = vpack.c.b16 %v1209, %v1209
      %v1274 = vpack.c.b16 %v1210, %v1210
      %v1275 = vpack.c.b16 %v1211, %v1211
      %v1276 = vpack.c.b16 %v1212, %v1212
      %v1277 = vpack.c.b16 %v1213, %v1213
      %v1278 = vpack.c.b16 %v1214, %v1214
      %1343 = vst [vmem:[#allocation3] sm:$0xf] %v1215
      %1344 = vst [vmem:[#allocation3 + $0x4] sm:$0xf] %v1216
      %1345 = vst [vmem:[#allocation3 + $0x8] sm:$0xf] %v1217
      %1346 = vst [vmem:[#allocation3 + $0xc] sm:$0xf] %v1218
      %1347 = vst [vmem:[#allocation3 + $0x10] sm:$0xf] %v1219
      %1348 = vst [vmem:[#allocation3 + $0x14] sm:$0xf] %v1220
      %1349 = vst [vmem:[#allocation3 + $0x18] sm:$0xf] %v1221
      %1350 = vst [vmem:[#allocation3 + $0x1c] sm:$0xf] %v1222
      %1351 = vst [vmem:[#allocation3 + $0x20] sm:$0xf] %v1223
      %1352 = vst [vmem:[#allocation3 + $0x24] sm:$0xf] %v1224
      %1353 = vst [vmem:[#allocation3 + $0x28] sm:$0xf] %v1225
      %1354 = vst [vmem:[#allocation3 + $0x2c] sm:$0xf] %v1226
      %1355 = vst [vmem:[#allocation3 + $0x30] sm:$0xf] %v1227
      %1356 = vst [vmem:[#allocation3 + $0x34] sm:$0xf] %v1228
      %1357 = vst [vmem:[#allocation3 + $0x38] sm:$0xf] %v1229
      %1358 = vst [vmem:[#allocation3 + $0x3c] sm:$0xf] %v1230
      %1359 = vst [vmem:[#allocation3 + $0x40] sm:$0xf] %v1231
      %1360 = vst [vmem:[#allocation3 + $0x44] sm:$0xf] %v1232
      %1361 = vst [vmem:[#allocation3 + $0x48] sm:$0xf] %v1233
      %1362 = vst [vmem:[#allocation3 + $0x4c] sm:$0xf] %v1234
      %1363 = vst [vmem:[#allocation3 + $0x50] sm:$0xf] %v1235
      %1364 = vst [vmem:[#allocation3 + $0x54] sm:$0xf] %v1236
      %1365 = vst [vmem:[#allocation3 + $0x58] sm:$0xf] %v1237
      %1366 = vst [vmem:[#allocation3 + $0x5c] sm:$0xf] %v1238
      %1367 = vst [vmem:[#allocation3 + $0x60] sm:$0xf] %v1239
      %1368 = vst [vmem:[#allocation3 + $0x64] sm:$0xf] %v1240
      %1369 = vst [vmem:[#allocation3 + $0x68] sm:$0xf] %v1241
      %1370 = vst [vmem:[#allocation3 + $0x6c] sm:$0xf] %v1242
      %1371 = vst [vmem:[#allocation3 + $0x70] sm:$0xf] %v1243
      %1372 = vst [vmem:[#allocation3 + $0x74] sm:$0xf] %v1244
      %1373 = vst [vmem:[#allocation3 + $0x78] sm:$0xf] %v1245
      %1374 = vst [vmem:[#allocation3 + $0x7c] sm:$0xf] %v1246
      %1375 = vst [vmem:[#allocation3 + $0x80] sm:$0xf] %v1247
      %1376 = vst [vmem:[#allocation3 + $0x84] sm:$0xf] %v1248
      %1377 = vst [vmem:[#allocation3 + $0x88] sm:$0xf] %v1249
      %1378 = vst [vmem:[#allocation3 + $0x8c] sm:$0xf] %v1250
      %1379 = vst [vmem:[#allocation3 + $0x90] sm:$0xf] %v1251
      %1380 = vst [vmem:[#allocation3 + $0x94] sm:$0xf] %v1252
      %1381 = vst [vmem:[#allocation3 + $0x98] sm:$0xf] %v1253
      %1382 = vst [vmem:[#allocation3 + $0x9c] sm:$0xf] %v1254
      %1383 = vst [vmem:[#allocation3 + $0xa0] sm:$0xf] %v1255
      %1384 = vst [vmem:[#allocation3 + $0xa4] sm:$0xf] %v1256
      %1385 = vst [vmem:[#allocation3 + $0xa8] sm:$0xf] %v1257
      %1386 = vst [vmem:[#allocation3 + $0xac] sm:$0xf] %v1258
      %1387 = vst [vmem:[#allocation3 + $0xb0] sm:$0xf] %v1259
      %1388 = vst [vmem:[#allocation3 + $0xb4] sm:$0xf] %v1260
      %1389 = vst [vmem:[#allocation3 + $0xb8] sm:$0xf] %v1261
      %1390 = vst [vmem:[#allocation3 + $0xbc] sm:$0xf] %v1262
      %1391 = vst [vmem:[#allocation3 + $0xc0] sm:$0xf] %v1263
      %1392 = vst [vmem:[#allocation3 + $0xc4] sm:$0xf] %v1264
      %1393 = vst [vmem:[#allocation3 + $0xc8] sm:$0xf] %v1265
      %1394 = vst [vmem:[#allocation3 + $0xcc] sm:$0xf] %v1266
      %1395 = vst [vmem:[#allocation3 + $0xd0] sm:$0xf] %v1267
      %1396 = vst [vmem:[#allocation3 + $0xd4] sm:$0xf] %v1268
      %1397 = vst [vmem:[#allocation3 + $0xd8] sm:$0xf] %v1269
      %1398 = vst [vmem:[#allocation3 + $0xdc] sm:$0xf] %v1270
      %1399 = vst [vmem:[#allocation3 + $0xe0] sm:$0xf] %v1271
      %1400 = vst [vmem:[#allocation3 + $0xe4] sm:$0xf] %v1272
      %1401 = vst [vmem:[#allocation3 + $0xe8] sm:$0xf] %v1273
      %1402 = vst [vmem:[#allocation3 + $0xec] sm:$0xf] %v1274
      %1403 = vst [vmem:[#allocation3 + $0xf0] sm:$0xf] %v1275
      %1404 = vst [vmem:[#allocation3 + $0xf4] sm:$0xf] %v1276
      %1405 = vst [vmem:[#allocation3 + $0xf8] sm:$0xf] %v1277
      %1406 = vst [vmem:[#allocation3 + $0xfc] sm:$0xf] %v1278
    $region21: #{conv_dense.1} parent=1 // pred_fallthru
      _
    // Predicated region
    $region22: #{conv_dense.1} parent=1 // pred_check
      _
    $region23: #{conv_dense.1} parent=1 // pred_check_branch
      %1408 = sbr.rel (0) target = $region25
    $region24: #{conv_dense.1} parent=1 // pred_region
      %s1410 = ssub.s32 4096, 4096
      %1411 = vsyncadd [#allocation4], %s1410
      %s1412 = sshll.u32 [#allocation3], 4
      %s1413 = int_to_ptr.vmem [resolvable:$true] %s1412
      %1418 = dma.vmem_to_hbm [thread:$0]  %s1413, 4096, %s3, [#allocation4], 64, 64, 4
    $region25: #{conv_dense.1} parent=1 // pred_fallthru
      _
    // Predicated region
    $region26: #{conv_dense.1} parent=1 // pred_check
      _
    $region27: #{conv_dense.1} parent=1 // pred_check_branch
      %1420 = sbr.rel (0) target = $region29
    $region28: #{conv_dense.1} parent=1 // pred_region
      %1421 = dma.done [#allocation4], 4096
    $region29: #{conv_dense.1} parent=1 // pred_fallthru
      _
    %1422 = vsyncpa [#allocation4], 1

</llo_original>
